<compile_context>
chip_gen: v7x
topology: tpu7x:2x2x1
jax: 0.10.0
libtpu: 0.0.40
codegen_flags: <defaults>
</compile_context>

<pallas_src>
import functools

import jax
import jax.numpy as jnp
from jax import lax
from jax.experimental import pallas as pl
from jax.experimental.pallas import tpu as pltpu


def _default_vmem_limit():
    """Generation-aware scoped-VMEM budget (3/4 of capacity, conservative cap)."""
    try:
        cap = int(pltpu.get_tpu_info().vmem_capacity_bytes)
    except Exception:
        cap = 64 * 1024 * 1024          # safe fallback on every generation
    return min(cap * 3 // 4, 96 * 1024 * 1024)


_VMEM_LIMIT = _default_vmem_limit()


# ----------------------------------------------------------------------------
# Wrapper-side constant builders (tiny, one-time).
# ----------------------------------------------------------------------------
def _banded_weights(w_hwio, W):
    """Fold the 3 horizontal taps + zero-padding into banded (W*Cin, W*Cout)
    matrices, one per vertical tap kh.  Returns (3, W*Cin, W*Cout) f32."""
    w = w_hwio.astype(jnp.float32)                      # (3, 3, Cin, Cout)
    _, _, cin, cout = w.shape
    win = jnp.arange(W)[:, None]                        # input column index
    wout = jnp.arange(W)[None, :]                       # output column index
    mats = []
    for kh in range(3):
        acc = jnp.zeros((W, cin, W, cout), jnp.float32)
        for kw in range(3):
            band = ((win - wout) == (kw - 1)).astype(jnp.float32)   # (W, W)
            acc = acc + band[:, None, :, None] * w[kh, kw][None, :, None, :]
        mats.append(acc.reshape(W * cin, W * cout))
    return jnp.stack(mats, axis=0)


def _channel_sum_matrix(W, c):
    """(W*c, c) 0/1 matrix summing the lane-interleaved layout per channel."""
    return jnp.tile(jnp.eye(c, dtype=jnp.float32), (W, 1))


# ----------------------------------------------------------------------------
# Conv kernel: 3x3 / stride 1 / pad 1, one image per grid step.
# Optionally applies the previous stage's fused BN-affine + ReLU to its input.
# ----------------------------------------------------------------------------
def _conv3x3_kernel(x_ref, wb_ref, scale_ref, shift_ref, smat_ref,
                    y_ref, stats_ref, *, apply_bn_relu):
    # x_ref:     (1, H, W*Cin)        lane-flattened activation (unpadded)
    # wb_ref:    (3, W*Cin, W*Cout)   banded weights, one slab per kh
    # scale_ref: (1, W*Cin)           folded-BN scale (only if apply_bn_relu)
    # shift_ref: (1, W*Cin)           folded-BN shift (only if apply_bn_relu)
    # smat_ref:  (W*Cout, Cout)       channel-summing matrix for BN stats
    # y_ref:     (1, H, W*Cout)       lane-dense conv output
    # stats_ref: (1, 2, Cout)         per-image [sum, sum_sq] of the output
    x = x_ref[0]                                            # (H, W*Cin)

    if apply_bn_relu:
        # Fused BN(affine)+ReLU of the previous stage.  No border masking is
        # needed: there is no stored padding, and the synthesized zero rows
        # below are appended after this transform.
        x = jnp.maximum(x * scale_ref[...] + shift_ref[...], 0.0)

    zero_row = jnp.zeros((1, x.shape[1]), jnp.float32)
    x_dn = jnp.concatenate([zero_row, x[:-1, :]], axis=0)   # row h-1 (kh = 0)
    x_up = jnp.concatenate([x[1:, :], zero_row], axis=0)    # row h+1 (kh = 2)

    # Three dense, lane-dense MXU matmuls (f32 accumulation); the horizontal
    # taps + zero-pad live inside the banded weight slabs.
    y = jnp.dot(x_dn, wb_ref[0], preferred_element_type=jnp.float32)
    y = y + jnp.dot(x, wb_ref[1], preferred_element_type=jnp.float32)
    y = y + jnp.dot(x_up, wb_ref[2], preferred_element_type=jnp.float32)

    y_ref[0] = y                                            # (H, W*Cout), lane-dense

    # BN batch-stat epilogue: per-channel sums via a small matmul (no lane
    # relayout), then a sublane reduction.
    s = smat_ref[...]
    cs = jnp.sum(jnp.dot(y, s, preferred_element_type=jnp.float32),
                 axis=0, keepdims=True)                     # (1, Cout)
    css = jnp.sum(jnp.dot(y * y, s, preferred_element_type=jnp.float32),
                  axis=0, keepdims=True)                    # (1, Cout)
    stats_ref[0] = jnp.concatenate([cs, css], axis=0)       # (2, Cout)


def conv3x3(x_flat, wb, scale_lane, shift_lane, smat, *, apply_bn_relu):
    """x_flat: (N, H, W*Cin) lane-flattened.  Returns (y, stats):
    y = (N, H, W*Cout) lane-flattened, stats = (N, 2, Cout) [sum, sum_sq]."""
    N, H, wc_in = x_flat.shape
    wc_out = wb.shape[-1]
    cout = smat.shape[-1]

    kernel = functools.partial(_conv3x3_kernel, apply_bn_relu=apply_bn_relu)
    return pl.pallas_call(
        kernel,
        out_shape=(
            jax.ShapeDtypeStruct((N, H, wc_out), jnp.float32),
            jax.ShapeDtypeStruct((N, 2, cout), jnp.float32),
        ),
        grid=(N,),
        in_specs=[
            pl.BlockSpec((1, H, wc_in), lambda n: (n, 0, 0)),
            pl.BlockSpec((3, wc_in, wc_out), lambda n: (0, 0, 0)),   # resident
            pl.BlockSpec((1, wc_in), lambda n: (0, 0)),
            pl.BlockSpec((1, wc_in), lambda n: (0, 0)),
            pl.BlockSpec((wc_out, cout), lambda n: (0, 0)),
        ],
        out_specs=(
            pl.BlockSpec((1, H, wc_out), lambda n: (n, 0, 0)),
            pl.BlockSpec((1, 2, cout), lambda n: (n, 0, 0)),
        ),
        compiler_params=pltpu.CompilerParams(
            dimension_semantics=("parallel",),
            vmem_limit_bytes=_VMEM_LIMIT),
    )(x_flat, wb, scale_lane, shift_lane, smat)


# ----------------------------------------------------------------------------
# Final BN(affine) + ReLU, lane-dense on (N, H, W*C).
# ----------------------------------------------------------------------------
def _bn_relu_kernel(x_ref, scale_ref, shift_ref, o_ref):
    o_ref[0] = jnp.maximum(x_ref[0] * scale_ref[...] + shift_ref[...], 0.0)


def bn_relu(y_flat, scale_lane, shift_lane):
    N, H, wc = y_flat.shape
    return pl.pallas_call(
        _bn_relu_kernel,
        out_shape=jax.ShapeDtypeStruct((N, H, wc), jnp.float32),
        grid=(N,),
        in_specs=[
            pl.BlockSpec((1, H, wc), lambda n: (n, 0, 0)),
            pl.BlockSpec((1, wc), lambda n: (0, 0)),
            pl.BlockSpec((1, wc), lambda n: (0, 0)),
        ],
        out_specs=pl.BlockSpec((1, H, wc), lambda n: (n, 0, 0)),
        compiler_params=pltpu.CompilerParams(
            dimension_semantics=("parallel",),
            vmem_limit_bytes=_VMEM_LIMIT),
    )(y_flat, scale_lane, shift_lane)


# ----------------------------------------------------------------------------
# Full double_conv2d forward (matches the PyTorch module in training mode).
# ----------------------------------------------------------------------------
def double_conv2d_forward(x_nchw, w1, g1, b1, w2, g2, b2, eps=1e-5):
    N, cin, H, W = x_nchw.shape
    c1 = w1.shape[-1]
    c2 = w2.shape[-1]
    count = N * H * W

    # Whole-image-per-grid-step working set (rough, with double buffering).
    per_image = 4 * (2 * H * W * cin + 4 * H * W * max(c1, c2)
                     + 3 * W * max(cin, c1) * W * max(c1, c2))
    assert per_image < _VMEM_LIMIT, \
        "image too large for single-tile kernel; TODO(synk): row-tile with halos"

    # NCHW -> lane-flattened (N, H, W*Cin).  TODO(synk): fuse into conv1.
    x = jnp.transpose(x_nchw, (0, 2, 3, 1)).astype(jnp.float32)
    x = x.reshape(N, H, W * cin)

    wb1 = _banded_weights(w1, W)                 # (3, W*cin, W*c1)
    wb2 = _banded_weights(w2, W)                 # (3, W*c1,  W*c2)
    s1m = _channel_sum_matrix(W, c1)
    s2m = _channel_sum_matrix(W, c2)

    # conv1 (+ per-channel stats of y1 emitted by the kernel epilogue)
    one = jnp.ones((1, W * cin), jnp.float32)
    zero = jnp.zeros((1, W * cin), jnp.float32)
    y1, st1 = conv3x3(x, wb1, one, zero, s1m, apply_bn_relu=False)

    s1 = jnp.sum(st1, axis=0)                    # (2, c1) — tiny reduction
    mu1 = s1[0] / count
    var1 = s1[1] / count - mu1 * mu1             # biased var, as PyTorch BN fwd
    scale1 = g1 / jnp.sqrt(var1 + eps)
    shift1 = b1 - mu1 * scale1

    # conv2 with fused BN1-affine + ReLU prologue, reading the UNPADDED y1.
    y2, st2 = conv3x3(y1, wb2,
                      jnp.tile(scale1, W).reshape(1, W * c1),
                      jnp.tile(shift1, W).reshape(1, W * c1),
                      s2m, apply_bn_relu=True)

    s2 = jnp.sum(st2, axis=0)
    mu2 = s2[0] / count
    var2 = s2[1] / count - mu2 * mu2
    scale2 = g2 / jnp.sqrt(var2 + eps)
    shift2 = b2 - mu2 * scale2

    # Final BN2 + ReLU (needs batch stats of y2, so it cannot fuse into conv2).
    a2 = bn_relu(y2,
                 jnp.tile(scale2, W).reshape(1, W * c2),
                 jnp.tile(shift2, W).reshape(1, W * c2))

    # Lane-flat -> NCHW.  TODO(synk): fuse this transpose into bn_relu.
    out = a2.reshape(N, H, W, c2)
    return jnp.transpose(out, (0, 3, 1, 2))


# ----------------------------------------------------------------------------
# Pure-JAX reference (lax.conv) for a correctness check.
# ----------------------------------------------------------------------------
def _reference(x_nchw, w1, g1, b1, w2, g2, b2, eps=1e-5):
    x = jnp.transpose(x_nchw, (0, 2, 3, 1))
    dn = ("NHWC", "HWIO", "NHWC")

    def block(inp, w, g, b):
        y = lax.conv_general_dilated(inp, w, (1, 1), "SAME",
                                     dimension_numbers=dn)
        mu = jnp.mean(y, axis=(0, 1, 2))
        var = jnp.var(y, axis=(0, 1, 2))
        y = (y - mu) / jnp.sqrt(var + eps) * g + b
        return jnp.maximum(y, 0.0)

    out = block(block(x, w1, g1, b1), w2, g2, b2)
    return jnp.transpose(out, (0, 3, 1, 2))


if __name__ == "__main__":
    N, Cin, Cout, H, W = 2, 4, 8, 16, 16

    key = jax.random.PRNGKey(0)
    kx, k1, k2, kg1, kb1, kg2, kb2 = jax.random.split(key, 7)

    # Deterministic synthetic parameters (HWIO conv weights, non-trivial BN
    # gamma/beta to exercise the affine folding).
    x = jax.random.normal(kx, (N, Cin, H, W), jnp.float32)
    w1 = 0.1 * jax.random.normal(k1, (3, 3, Cin, Cout), jnp.float32)
    w2 = 0.1 * jax.random.normal(k2, (3, 3, Cout, Cout), jnp.float32)
    g1 = 1.0 + 0.1 * jax.random.normal(kg1, (Cout,), jnp.float32)
    b1 = 0.1 * jax.random.normal(kb1, (Cout,), jnp.float32)
    g2 = 1.0 + 0.1 * jax.random.normal(kg2, (Cout,), jnp.float32)
    b2 = 0.1 * jax.random.normal(kb2, (Cout,), jnp.float32)

    out = jax.jit(double_conv2d_forward)(x, w1, g1, b1, w2, g2, b2)
    out = jax.block_until_ready(out)

    ref = _reference(x, w1, g1, b1, w2, g2, b2)
    assert out.shape == (N, Cout, H, W)
    assert out.dtype == jnp.float32
    err = float(jnp.max(jnp.abs(out - ref)))
    assert jnp.allclose(out, ref, atol=5e-4, rtol=5e-4), err

    print("KERNEL_OK")
</pallas_src>

<mosaic_0001>
module attributes {stable_mosaic.version = 11 : i64} {
  func.func @_conv3x3_kernel(%arg0: i32, %arg1: memref<1x16x64xf32, #tpu.memory_space<vmem>>, %arg2: memref<3x64x128xf32, #tpu.memory_space<vmem>>, %arg3: memref<1x64xf32, #tpu.memory_space<vmem>>, %arg4: memref<1x64xf32, #tpu.memory_space<vmem>>, %arg5: memref<128x8xf32, #tpu.memory_space<vmem>>, %arg6: memref<1x16x128xf32, #tpu.memory_space<vmem>>, %arg7: memref<1x2x8xf32, #tpu.memory_space<vmem>>) attributes {dimension_semantics = [#tpu.dimension_semantics<parallel>], iteration_bounds = array<i64: 2>, scalar_prefetch = 0 : i64, scratch_operands = 0 : i64, tpu.core_type = #tpu.core_type<tc>, window_params = [{transform_indices = @transform_0, window_bounds = array<i64: 1, 16, 64>}, {pipeline_mode = #tpu.pipeline_mode<synchronous>, transform_indices = @transform_1, window_bounds = array<i64: 3, 64, 128>}, {pipeline_mode = #tpu.pipeline_mode<synchronous>, transform_indices = @transform_2, window_bounds = array<i64: 1, 64>}, {pipeline_mode = #tpu.pipeline_mode<synchronous>, transform_indices = @transform_3, window_bounds = array<i64: 1, 64>}, {pipeline_mode = #tpu.pipeline_mode<synchronous>, transform_indices = @transform_4, window_bounds = array<i64: 128, 8>}, {transform_indices = @transform_5, window_bounds = array<i64: 1, 16, 128>}, {transform_indices = @transform_6, window_bounds = array<i64: 1, 2, 8>}]} {
    %c0 = arith.constant 0 : index
    %c0_0 = arith.constant 0 : index
    %c0_1 = arith.constant 0 : index
    %0 = vector.load %arg1[%c0, %c0_0, %c0_1] : memref<1x16x64xf32, #tpu.memory_space<vmem>>, vector<1x16x64xf32>
    %1 = vector.shape_cast %0 : vector<1x16x64xf32> to vector<16x64xf32>
    %cst = arith.constant 0.000000e+00 : f32
    %2 = vector.broadcast %cst : f32 to vector<1x64xf32>
    %3 = vector.extract_strided_slice %1 {offsets = [0, 0], sizes = [15, 64], strides = [1, 1]} : vector<16x64xf32> to vector<15x64xf32>
    %4 = tpu.concatenate %2, %3 in 0 : vector<1x64xf32>, vector<15x64xf32> -> vector<16x64xf32>
    %5 = vector.extract_strided_slice %1 {offsets = [1, 0], sizes = [15, 64], strides = [1, 1]} : vector<16x64xf32> to vector<15x64xf32>
    %6 = tpu.concatenate %5, %2 in 0 : vector<15x64xf32>, vector<1x64xf32> -> vector<16x64xf32>
    %c0_2 = arith.constant 0 : index
    %c0_3 = arith.constant 0 : index
    %c0_4 = arith.constant 0 : index
    %7 = vector.load %arg2[%c0_2, %c0_3, %c0_4] : memref<3x64x128xf32, #tpu.memory_space<vmem>>, vector<1x64x128xf32>
    %8 = vector.shape_cast %7 : vector<1x64x128xf32> to vector<64x128xf32>
    %cst_5 = arith.constant dense<0.000000e+00> : vector<16x128xf32>
    %9 = tpu.matmul %4, %8, %cst_5 {dimension_numbers = #tpu.dot_dimension_numbers<[1], [0], [0], [1], [0, 0, 1, 1], [], []>} : vector<16x64xf32>, vector<64x128xf32>, vector<16x128xf32> -> vector<16x128xf32>
    %c1 = arith.constant 1 : index
    %c0_6 = arith.constant 0 : index
    %c0_7 = arith.constant 0 : index
    %10 = vector.load %arg2[%c1, %c0_6, %c0_7] : memref<3x64x128xf32, #tpu.memory_space<vmem>>, vector<1x64x128xf32>
    %11 = vector.shape_cast %10 : vector<1x64x128xf32> to vector<64x128xf32>
    %cst_8 = arith.constant dense<0.000000e+00> : vector<16x128xf32>
    %12 = tpu.matmul %1, %11, %cst_8 {dimension_numbers = #tpu.dot_dimension_numbers<[1], [0], [0], [1], [0, 0, 1, 1], [], []>} : vector<16x64xf32>, vector<64x128xf32>, vector<16x128xf32> -> vector<16x128xf32>
    %13 = arith.addf %9, %12 : vector<16x128xf32>
    %c2 = arith.constant 2 : index
    %c0_9 = arith.constant 0 : index
    %c0_10 = arith.constant 0 : index
    %14 = vector.load %arg2[%c2, %c0_9, %c0_10] : memref<3x64x128xf32, #tpu.memory_space<vmem>>, vector<1x64x128xf32>
    %15 = vector.shape_cast %14 : vector<1x64x128xf32> to vector<64x128xf32>
    %cst_11 = arith.constant dense<0.000000e+00> : vector<16x128xf32>
    %16 = tpu.matmul %6, %15, %cst_11 {dimension_numbers = #tpu.dot_dimension_numbers<[1], [0], [0], [1], [0, 0, 1, 1], [], []>} : vector<16x64xf32>, vector<64x128xf32>, vector<16x128xf32> -> vector<16x128xf32>
    %17 = arith.addf %13, %16 : vector<16x128xf32>
    %c0_12 = arith.constant 0 : index
    %c0_13 = arith.constant 0 : index
    %c0_14 = arith.constant 0 : index
    %18 = vector.load %arg6[%c0_12, %c0_13, %c0_14] : memref<1x16x128xf32, #tpu.memory_space<vmem>>, vector<1x16x128xf32>
    %19 = vector.shape_cast %18 : vector<1x16x128xf32> to vector<16x128xf32>
    %20 = vector.shape_cast %17 : vector<16x128xf32> to vector<1x16x128xf32>
    tpu.vector_store %arg6[%c0_12, %c0_13, %c0_14], %20 {strides = array<i32>} : memref<1x16x128xf32, #tpu.memory_space<vmem>>, vector<1x16x128xf32>,
    %c0_15 = arith.constant 0 : index
    %c0_16 = arith.constant 0 : index
    %21 = vector.load %arg5[%c0_15, %c0_16] : memref<128x8xf32, #tpu.memory_space<vmem>>, vector<128x8xf32>
    %cst_17 = arith.constant dense<0.000000e+00> : vector<16x8xf32>
    %22 = tpu.matmul %17, %21, %cst_17 {dimension_numbers = #tpu.dot_dimension_numbers<[1], [0], [0], [1], [0, 0, 1, 1], [], []>} : vector<16x128xf32>, vector<128x8xf32>, vector<16x8xf32> -> vector<16x8xf32>
    %cst_18 = arith.constant dense<0.000000e+00> : vector<8xf32>
    %23 = vector.multi_reduction <add>, %22, %cst_18 [0] : vector<16x8xf32> to vector<8xf32>
    %24 = vector.shape_cast %23 : vector<8xf32> to vector<1x8xf32>
    %25 = arith.mulf %17, %17 : vector<16x128xf32>
    %cst_19 = arith.constant dense<0.000000e+00> : vector<16x8xf32>
    %26 = tpu.matmul %25, %21, %cst_19 {dimension_numbers = #tpu.dot_dimension_numbers<[1], [0], [0], [1], [0, 0, 1, 1], [], []>} : vector<16x128xf32>, vector<128x8xf32>, vector<16x8xf32> -> vector<16x8xf32>
    %cst_20 = arith.constant dense<0.000000e+00> : vector<8xf32>
    %27 = vector.multi_reduction <add>, %26, %cst_20 [0] : vector<16x8xf32> to vector<8xf32>
    %28 = vector.shape_cast %27 : vector<8xf32> to vector<1x8xf32>
    %29 = tpu.concatenate %24, %28 in 0 : vector<1x8xf32>, vector<1x8xf32> -> vector<2x8xf32>
    %c0_21 = arith.constant 0 : index
    %c0_22 = arith.constant 0 : index
    %c0_23 = arith.constant 0 : index
    %30 = vector.load %arg7[%c0_21, %c0_22, %c0_23] : memref<1x2x8xf32, #tpu.memory_space<vmem>>, vector<1x2x8xf32>
    %31 = vector.shape_cast %30 : vector<1x2x8xf32> to vector<2x8xf32>
    %32 = vector.shape_cast %29 : vector<2x8xf32> to vector<1x2x8xf32>
    tpu.vector_store %arg7[%c0_21, %c0_22, %c0_23], %32 {strides = array<i32>} : memref<1x2x8xf32, #tpu.memory_space<vmem>>, vector<1x2x8xf32>,
    return
  }
  func.func @transform_0(%arg0: i32) -> (i32, i32, i32) {
    %c0_i32 = arith.constant 0 : i32
    %c0_i32_0 = arith.constant 0 : i32
    %c0_i32_1 = arith.constant 0 : i32
    return %arg0, %c0_i32, %c0_i32_0 : i32, i32, i32
  }
  func.func @transform_1(%arg0: i32) -> (i32, i32, i32) {
    %c0_i32 = arith.constant 0 : i32
    %c0_i32_0 = arith.constant 0 : i32
    %c0_i32_1 = arith.constant 0 : i32
    %c0_i32_2 = arith.constant 0 : i32
    return %c0_i32, %c0_i32_0, %c0_i32_1 : i32, i32, i32
  }
  func.func @transform_2(%arg0: i32) -> (i32, i32) {
    %c0_i32 = arith.constant 0 : i32
    %c0_i32_0 = arith.constant 0 : i32
    %c0_i32_1 = arith.constant 0 : i32
    return %c0_i32, %c0_i32_0 : i32, i32
  }
  func.func @transform_3(%arg0: i32) -> (i32, i32) {
    %c0_i32 = arith.constant 0 : i32
    %c0_i32_0 = arith.constant 0 : i32
    %c0_i32_1 = arith.constant 0 : i32
    return %c0_i32, %c0_i32_0 : i32, i32
  }
  func.func @transform_4(%arg0: i32) -> (i32, i32) {
    %c0_i32 = arith.constant 0 : i32
    %c0_i32_0 = arith.constant 0 : i32
    %c0_i32_1 = arith.constant 0 : i32
    return %c0_i32, %c0_i32_0 : i32, i32
  }
  func.func @transform_5(%arg0: i32) -> (i32, i32, i32) {
    %c0_i32 = arith.constant 0 : i32
    %c0_i32_0 = arith.constant 0 : i32
    %c0_i32_1 = arith.constant 0 : i32
    return %arg0, %c0_i32, %c0_i32_0 : i32, i32, i32
  }
  func.func @transform_6(%arg0: i32) -> (i32, i32, i32) {
    %c0_i32 = arith.constant 0 : i32
    %c0_i32_0 = arith.constant 0 : i32
    %c0_i32_1 = arith.constant 0 : i32
    return %arg0, %c0_i32, %c0_i32_0 : i32, i32, i32
  }
}

module attributes {stable_mosaic.version = 11 : i64} {
  func.func @_conv3x3_kernel(%arg0: i32, %arg1: memref<1x16x128xf32, #tpu.memory_space<vmem>>, %arg2: memref<3x128x128xf32, #tpu.memory_space<vmem>>, %arg3: memref<1x128xf32, #tpu.memory_space<vmem>>, %arg4: memref<1x128xf32, #tpu.memory_space<vmem>>, %arg5: memref<128x8xf32, #tpu.memory_space<vmem>>, %arg6: memref<1x16x128xf32, #tpu.memory_space<vmem>>, %arg7: memref<1x2x8xf32, #tpu.memory_space<vmem>>) attributes {dimension_semantics = [#tpu.dimension_semantics<parallel>], iteration_bounds = array<i64: 2>, scalar_prefetch = 0 : i64, scratch_operands = 0 : i64, tpu.core_type = #tpu.core_type<tc>, window_params = [{transform_indices = @transform_0, window_bounds = array<i64: 1, 16, 128>}, {pipeline_mode = #tpu.pipeline_mode<synchronous>, transform_indices = @transform_1, window_bounds = array<i64: 3, 128, 128>}, {pipeline_mode = #tpu.pipeline_mode<synchronous>, transform_indices = @transform_2, window_bounds = array<i64: 1, 128>}, {pipeline_mode = #tpu.pipeline_mode<synchronous>, transform_indices = @transform_3, window_bounds = array<i64: 1, 128>}, {pipeline_mode = #tpu.pipeline_mode<synchronous>, transform_indices = @transform_4, window_bounds = array<i64: 128, 8>}, {transform_indices = @transform_5, window_bounds = array<i64: 1, 16, 128>}, {transform_indices = @transform_6, window_bounds = array<i64: 1, 2, 8>}]} {
    %c0 = arith.constant 0 : index
    %c0_0 = arith.constant 0 : index
    %c0_1 = arith.constant 0 : index
    %0 = vector.load %arg1[%c0, %c0_0, %c0_1] : memref<1x16x128xf32, #tpu.memory_space<vmem>>, vector<1x16x128xf32>
    %1 = vector.shape_cast %0 : vector<1x16x128xf32> to vector<16x128xf32>
    %c0_2 = arith.constant 0 : index
    %c0_3 = arith.constant 0 : index
    %2 = vector.load %arg3[%c0_2, %c0_3] : memref<1x128xf32, #tpu.memory_space<vmem>>, vector<1x128xf32>
    %3 = vector.broadcast %2 : vector<1x128xf32> to vector<16x128xf32>
    %4 = arith.mulf %1, %3 : vector<16x128xf32>
    %c0_4 = arith.constant 0 : index
    %c0_5 = arith.constant 0 : index
    %5 = vector.load %arg4[%c0_4, %c0_5] : memref<1x128xf32, #tpu.memory_space<vmem>>, vector<1x128xf32>
    %6 = vector.broadcast %5 : vector<1x128xf32> to vector<16x128xf32>
    %7 = arith.addf %4, %6 : vector<16x128xf32>
    %cst = arith.constant 0.000000e+00 : f32
    %8 = vector.broadcast %cst : f32 to vector<16x128xf32>
    %9 = arith.maximumf %7, %8 : vector<16x128xf32>
    %cst_6 = arith.constant 0.000000e+00 : f32
    %10 = vector.broadcast %cst_6 : f32 to vector<1x128xf32>
    %11 = vector.extract_strided_slice %9 {offsets = [0, 0], sizes = [15, 128], strides = [1, 1]} : vector<16x128xf32> to vector<15x128xf32>
    %12 = tpu.concatenate %10, %11 in 0 : vector<1x128xf32>, vector<15x128xf32> -> vector<16x128xf32>
    %13 = vector.extract_strided_slice %9 {offsets = [1, 0], sizes = [15, 128], strides = [1, 1]} : vector<16x128xf32> to vector<15x128xf32>
    %14 = tpu.concatenate %13, %10 in 0 : vector<15x128xf32>, vector<1x128xf32> -> vector<16x128xf32>
    %c0_7 = arith.constant 0 : index
    %c0_8 = arith.constant 0 : index
    %c0_9 = arith.constant 0 : index
    %15 = vector.load %arg2[%c0_7, %c0_8, %c0_9] : memref<3x128x128xf32, #tpu.memory_space<vmem>>, vector<1x128x128xf32>
    %16 = vector.shape_cast %15 : vector<1x128x128xf32> to vector<128x128xf32>
    %cst_10 = arith.constant dense<0.000000e+00> : vector<16x128xf32>
    %17 = tpu.matmul %12, %16, %cst_10 {dimension_numbers = #tpu.dot_dimension_numbers<[1], [0], [0], [1], [0, 0, 1, 1], [], []>} : vector<16x128xf32>, vector<128x128xf32>, vector<16x128xf32> -> vector<16x128xf32>
    %c1 = arith.constant 1 : index
    %c0_11 = arith.constant 0 : index
    %c0_12 = arith.constant 0 : index
    %18 = vector.load %arg2[%c1, %c0_11, %c0_12] : memref<3x128x128xf32, #tpu.memory_space<vmem>>, vector<1x128x128xf32>
    %19 = vector.shape_cast %18 : vector<1x128x128xf32> to vector<128x128xf32>
    %cst_13 = arith.constant dense<0.000000e+00> : vector<16x128xf32>
    %20 = tpu.matmul %9, %19, %cst_13 {dimension_numbers = #tpu.dot_dimension_numbers<[1], [0], [0], [1], [0, 0, 1, 1], [], []>} : vector<16x128xf32>, vector<128x128xf32>, vector<16x128xf32> -> vector<16x128xf32>
    %21 = arith.addf %17, %20 : vector<16x128xf32>
    %c2 = arith.constant 2 : index
    %c0_14 = arith.constant 0 : index
    %c0_15 = arith.constant 0 : index
    %22 = vector.load %arg2[%c2, %c0_14, %c0_15] : memref<3x128x128xf32, #tpu.memory_space<vmem>>, vector<1x128x128xf32>
    %23 = vector.shape_cast %22 : vector<1x128x128xf32> to vector<128x128xf32>
    %cst_16 = arith.constant dense<0.000000e+00> : vector<16x128xf32>
    %24 = tpu.matmul %14, %23, %cst_16 {dimension_numbers = #tpu.dot_dimension_numbers<[1], [0], [0], [1], [0, 0, 1, 1], [], []>} : vector<16x128xf32>, vector<128x128xf32>, vector<16x128xf32> -> vector<16x128xf32>
    %25 = arith.addf %21, %24 : vector<16x128xf32>
    %c0_17 = arith.constant 0 : index
    %c0_18 = arith.constant 0 : index
    %c0_19 = arith.constant 0 : index
    %26 = vector.load %arg6[%c0_17, %c0_18, %c0_19] : memref<1x16x128xf32, #tpu.memory_space<vmem>>, vector<1x16x128xf32>
    %27 = vector.shape_cast %26 : vector<1x16x128xf32> to vector<16x128xf32>
    %28 = vector.shape_cast %25 : vector<16x128xf32> to vector<1x16x128xf32>
    tpu.vector_store %arg6[%c0_17, %c0_18, %c0_19], %28 {strides = array<i32>} : memref<1x16x128xf32, #tpu.memory_space<vmem>>, vector<1x16x128xf32>,
    %c0_20 = arith.constant 0 : index
    %c0_21 = arith.constant 0 : index
    %29 = vector.load %arg5[%c0_20, %c0_21] : memref<128x8xf32, #tpu.memory_space<vmem>>, vector<128x8xf32>
    %cst_22 = arith.constant dense<0.000000e+00> : vector<16x8xf32>
    %30 = tpu.matmul %25, %29, %cst_22 {dimension_numbers = #tpu.dot_dimension_numbers<[1], [0], [0], [1], [0, 0, 1, 1], [], []>} : vector<16x128xf32>, vector<128x8xf32>, vector<16x8xf32> -> vector<16x8xf32>
    %cst_23 = arith.constant dense<0.000000e+00> : vector<8xf32>
    %31 = vector.multi_reduction <add>, %30, %cst_23 [0] : vector<16x8xf32> to vector<8xf32>
    %32 = vector.shape_cast %31 : vector<8xf32> to vector<1x8xf32>
    %33 = arith.mulf %25, %25 : vector<16x128xf32>
    %cst_24 = arith.constant dense<0.000000e+00> : vector<16x8xf32>
    %34 = tpu.matmul %33, %29, %cst_24 {dimension_numbers = #tpu.dot_dimension_numbers<[1], [0], [0], [1], [0, 0, 1, 1], [], []>} : vector<16x128xf32>, vector<128x8xf32>, vector<16x8xf32> -> vector<16x8xf32>
    %cst_25 = arith.constant dense<0.000000e+00> : vector<8xf32>
    %35 = vector.multi_reduction <add>, %34, %cst_25 [0] : vector<16x8xf32> to vector<8xf32>
    %36 = vector.shape_cast %35 : vector<8xf32> to vector<1x8xf32>
    %37 = tpu.concatenate %32, %36 in 0 : vector<1x8xf32>, vector<1x8xf32> -> vector<2x8xf32>
    %c0_26 = arith.constant 0 : index
    %c0_27 = arith.constant 0 : index
    %c0_28 = arith.constant 0 : index
    %38 = vector.load %arg7[%c0_26, %c0_27, %c0_28] : memref<1x2x8xf32, #tpu.memory_space<vmem>>, vector<1x2x8xf32>
    %39 = vector.shape_cast %38 : vector<1x2x8xf32> to vector<2x8xf32>
    %40 = vector.shape_cast %37 : vector<2x8xf32> to vector<1x2x8xf32>
    tpu.vector_store %arg7[%c0_26, %c0_27, %c0_28], %40 {strides = array<i32>} : memref<1x2x8xf32, #tpu.memory_space<vmem>>, vector<1x2x8xf32>,
    return
  }
  func.func @transform_0(%arg0: i32) -> (i32, i32, i32) {
    %c0_i32 = arith.constant 0 : i32
    %c0_i32_0 = arith.constant 0 : i32
    %c0_i32_1 = arith.constant 0 : i32
    return %arg0, %c0_i32, %c0_i32_0 : i32, i32, i32
  }
  func.func @transform_1(%arg0: i32) -> (i32, i32, i32) {
    %c0_i32 = arith.constant 0 : i32
    %c0_i32_0 = arith.constant 0 : i32
    %c0_i32_1 = arith.constant 0 : i32
    %c0_i32_2 = arith.constant 0 : i32
    return %c0_i32, %c0_i32_0, %c0_i32_1 : i32, i32, i32
  }
  func.func @transform_2(%arg0: i32) -> (i32, i32) {
    %c0_i32 = arith.constant 0 : i32
    %c0_i32_0 = arith.constant 0 : i32
    %c0_i32_1 = arith.constant 0 : i32
    return %c0_i32, %c0_i32_0 : i32, i32
  }
  func.func @transform_3(%arg0: i32) -> (i32, i32) {
    %c0_i32 = arith.constant 0 : i32
    %c0_i32_0 = arith.constant 0 : i32
    %c0_i32_1 = arith.constant 0 : i32
    return %c0_i32, %c0_i32_0 : i32, i32
  }
  func.func @transform_4(%arg0: i32) -> (i32, i32) {
    %c0_i32 = arith.constant 0 : i32
    %c0_i32_0 = arith.constant 0 : i32
    %c0_i32_1 = arith.constant 0 : i32
    return %c0_i32, %c0_i32_0 : i32, i32
  }
  func.func @transform_5(%arg0: i32) -> (i32, i32, i32) {
    %c0_i32 = arith.constant 0 : i32
    %c0_i32_0 = arith.constant 0 : i32
    %c0_i32_1 = arith.constant 0 : i32
    return %arg0, %c0_i32, %c0_i32_0 : i32, i32, i32
  }
  func.func @transform_6(%arg0: i32) -> (i32, i32, i32) {
    %c0_i32 = arith.constant 0 : i32
    %c0_i32_0 = arith.constant 0 : i32
    %c0_i32_1 = arith.constant 0 : i32
    return %arg0, %c0_i32, %c0_i32_0 : i32, i32, i32
  }
}

module attributes {stable_mosaic.version = 11 : i64} {
  func.func @_bn_relu_kernel(%arg0: i32, %arg1: memref<1x16x128xf32, #tpu.memory_space<vmem>>, %arg2: memref<1x128xf32, #tpu.memory_space<vmem>>, %arg3: memref<1x128xf32, #tpu.memory_space<vmem>>, %arg4: memref<1x16x128xf32, #tpu.memory_space<vmem>>) attributes {dimension_semantics = [#tpu.dimension_semantics<parallel>], iteration_bounds = array<i64: 2>, scalar_prefetch = 0 : i64, scratch_operands = 0 : i64, tpu.core_type = #tpu.core_type<tc>, window_params = [{transform_indices = @transform_0, window_bounds = array<i64: 1, 16, 128>}, {pipeline_mode = #tpu.pipeline_mode<synchronous>, transform_indices = @transform_1, window_bounds = array<i64: 1, 128>}, {pipeline_mode = #tpu.pipeline_mode<synchronous>, transform_indices = @transform_2, window_bounds = array<i64: 1, 128>}, {transform_indices = @transform_3, window_bounds = array<i64: 1, 16, 128>}]} {
    %c0 = arith.constant 0 : index
    %c0_0 = arith.constant 0 : index
    %c0_1 = arith.constant 0 : index
    %0 = vector.load %arg1[%c0, %c0_0, %c0_1] : memref<1x16x128xf32, #tpu.memory_space<vmem>>, vector<1x16x128xf32>
    %1 = vector.shape_cast %0 : vector<1x16x128xf32> to vector<16x128xf32>
    %c0_2 = arith.constant 0 : index
    %c0_3 = arith.constant 0 : index
    %2 = vector.load %arg2[%c0_2, %c0_3] : memref<1x128xf32, #tpu.memory_space<vmem>>, vector<1x128xf32>
    %3 = vector.broadcast %2 : vector<1x128xf32> to vector<16x128xf32>
    %4 = arith.mulf %1, %3 : vector<16x128xf32>
    %c0_4 = arith.constant 0 : index
    %c0_5 = arith.constant 0 : index
    %5 = vector.load %arg3[%c0_4, %c0_5] : memref<1x128xf32, #tpu.memory_space<vmem>>, vector<1x128xf32>
    %6 = vector.broadcast %5 : vector<1x128xf32> to vector<16x128xf32>
    %7 = arith.addf %4, %6 : vector<16x128xf32>
    %cst = arith.constant 0.000000e+00 : f32
    %8 = vector.broadcast %cst : f32 to vector<16x128xf32>
    %9 = arith.maximumf %7, %8 : vector<16x128xf32>
    %c0_6 = arith.constant 0 : index
    %c0_7 = arith.constant 0 : index
    %c0_8 = arith.constant 0 : index
    %10 = vector.load %arg4[%c0_6, %c0_7, %c0_8] : memref<1x16x128xf32, #tpu.memory_space<vmem>>, vector<1x16x128xf32>
    %11 = vector.shape_cast %10 : vector<1x16x128xf32> to vector<16x128xf32>
    %12 = vector.shape_cast %9 : vector<16x128xf32> to vector<1x16x128xf32>
    tpu.vector_store %arg4[%c0_6, %c0_7, %c0_8], %12 {strides = array<i32>} : memref<1x16x128xf32, #tpu.memory_space<vmem>>, vector<1x16x128xf32>,
    return
  }
  func.func @transform_0(%arg0: i32) -> (i32, i32, i32) {
    %c0_i32 = arith.constant 0 : i32
    %c0_i32_0 = arith.constant 0 : i32
    %c0_i32_1 = arith.constant 0 : i32
    return %arg0, %c0_i32, %c0_i32_0 : i32, i32, i32
  }
  func.func @transform_1(%arg0: i32) -> (i32, i32) {
    %c0_i32 = arith.constant 0 : i32
    %c0_i32_0 = arith.constant 0 : i32
    %c0_i32_1 = arith.constant 0 : i32
    return %c0_i32, %c0_i32_0 : i32, i32
  }
  func.func @transform_2(%arg0: i32) -> (i32, i32) {
    %c0_i32 = arith.constant 0 : i32
    %c0_i32_0 = arith.constant 0 : i32
    %c0_i32_1 = arith.constant 0 : i32
    return %c0_i32, %c0_i32_0 : i32, i32
  }
  func.func @transform_3(%arg0: i32) -> (i32, i32, i32) {
    %c0_i32 = arith.constant 0 : i32
    %c0_i32_0 = arith.constant 0 : i32
    %c0_i32_1 = arith.constant 0 : i32
    return %arg0, %c0_i32, %c0_i32_0 : i32, i32, i32
  }
}

</mosaic_0001>

<llo_original>
// kernel: double_conv2d_forward.3
$region0: #{double_conv2d_forward.3}
  #allocation0 [shape = 'u32[]', space=smem, size = 0x4, offset = 0x4, fixed_abs, tag = 'smem constant byte address 0x4 - core index']
  #allocation1 [shape = 'u32[144,128]{1,0:T(1,128)}', space=vmem, size = 0x12000, scoped, tag = 'internal scratch']
  %s0 = inlined_call_operand.vmem [shape: f32[2,16,64], index: 0, kind: input, shape index: {}]
  %s1 = inlined_call_operand.vmem [shape: f32[3,64,128], index: 1, kind: input, shape index: {}]
  %s2 = inlined_call_operand.vmem [shape: f32[1,64], index: 2, kind: input, shape index: {}]
  %s3 = inlined_call_operand.vmem [shape: f32[1,64], index: 3, kind: input, shape index: {}]
  %s4 = inlined_call_operand.vmem [shape: f32[128,8], index: 4, kind: input, shape index: {}]
  %s5 = inlined_call_operand.vmem [shape: f32[2,16,128], index: 5, kind: output, shape index: {0}]
  %s6 = inlined_call_operand.vmem [shape: f32[2,2,8], index: 6, kind: output, shape index: {1}]
  %7 = xla_tuple %s5, %s6
  %s8 = sld [smem:[#allocation0]]
  $region61: #{double_conv2d_forward.3} parent=0
    _
  %s10 = ssub.s32 1, %s8
  %s11 = scalar_select 0, %s10, %s8
  loop: start=0, step=1, limit=4
  $region2: #{double_conv2d_forward.3} parent=0 // loop_pre_header
    _
  $region3: #{double_conv2d_forward.3} parent=0 // loop_header
    %s13 = sphi 0, %s17
    %p14 = scmp.ge.s32.totalorder %s13, 4
    %s23 = sphi 0, %s25
    %s26 = sphi 0, %s23
    %s27 = sphi 0, %s26
    %s43 = sphi 0, %s27
    %s47 = sphi 0, %s47
    %s49 = sphi 0, %s47
    %s50 = sphi 0, %s49
    %s64 = sphi 0, %s50
    %s68 = sphi 0, %s68
    %s70 = sphi 0, %s68
    %s71 = sphi 0, %s70
    %s85 = sphi 0, %s71
    %s89 = sphi 0, %s89
    %s91 = sphi 0, %s89
    %s92 = sphi 0, %s91
    %s106 = sphi 0, %s92
    %s110 = sphi 0, %s110
    %s112 = sphi 0, %s110
    %s113 = sphi 0, %s112
    %s127 = sphi 0, %s113
    %s133 = sphi 0, %s135
    %s136 = sphi 0, %s133
    %s137 = sphi 0, %s136
    %s153 = sphi 0, %s137
    %s159 = sphi 0, %s161
    %s162 = sphi 0, %s159
    %s163 = sphi 0, %s162
    %s179 = sphi 0, %s163
  $region4: #{double_conv2d_forward.3} parent=0 // loop_header_branch
    %16 = sbr.rel (%p14) target = $region8
  $region5: #{double_conv2d_forward.3} parent=0 // loop_body
    %s18 = ssub.s32 %s13, 1
    %s19 = ssub.s32 %s13, 2
    %s20 = sadd.s32 %s13, 1
    %s21 = ssub.s32 %s13, %s20
    %p22 = scmp.eq.s32.totalorder %s21, 0
    %s24 = sadd.s32 %s23, 1
    %s25 = scalar_select %p22, %s23, %s24
    %p28 = pneg %p22
    %p29 = scmp.eq.s32.totalorder %s13, 1
    %p30 = por %p28, %p29
    %p31 = scmp.ne.s32.totalorder %s23, %s26
    %p32 = scmp.eq.s32.totalorder %s13, 0
    %p33 = por %p31, %p32
    %p34 = scmp.ne.s32.totalorder %s23, %s26
    %p35 = scmp.eq.s32.totalorder %s18, 1
    %p36 = por %p34, %p35
    %p37 = scmp.ne.s32.totalorder %s26, %s27
    %p38 = scmp.eq.s32.totalorder %s18, 0
    %p39 = por %p37, %p38
    %p40 = scmp.ne.s32.totalorder %s26, %s27
    %p41 = scmp.eq.s32.totalorder %s19, 1
    %p42 = por %p40, %p41
    %p44 = scmp.ne.s32.totalorder %s27, %s43
    %p45 = scmp.eq.s32.totalorder %s19, 0
    %p46 = por %p44, %p45
    %s48 = sadd.s32 %s47, 1
    %p51 = scmp.eq.s32.totalorder %s13, 1
    %p52 = scmp.ne.s32.totalorder %s47, %s49
    %p53 = scmp.eq.s32.totalorder %s13, 0
    %p54 = por %p52, %p53
    %p55 = scmp.ne.s32.totalorder %s47, %s49
    %p56 = scmp.eq.s32.totalorder %s18, 1
    %p57 = por %p55, %p56
    %p58 = scmp.ne.s32.totalorder %s49, %s50
    %p59 = scmp.eq.s32.totalorder %s18, 0
    %p60 = por %p58, %p59
    %p61 = scmp.ne.s32.totalorder %s49, %s50
    %p62 = scmp.eq.s32.totalorder %s19, 1
    %p63 = por %p61, %p62
    %p65 = scmp.ne.s32.totalorder %s50, %s64
    %p66 = scmp.eq.s32.totalorder %s19, 0
    %p67 = por %p65, %p66
    %s69 = sadd.s32 %s68, 1
    %p72 = scmp.eq.s32.totalorder %s13, 1
    %p73 = scmp.ne.s32.totalorder %s68, %s70
    %p74 = scmp.eq.s32.totalorder %s13, 0
    %p75 = por %p73, %p74
    %p76 = scmp.ne.s32.totalorder %s68, %s70
    %p77 = scmp.eq.s32.totalorder %s18, 1
    %p78 = por %p76, %p77
    %p79 = scmp.ne.s32.totalorder %s70, %s71
    %p80 = scmp.eq.s32.totalorder %s18, 0
    %p81 = por %p79, %p80
    %p82 = scmp.ne.s32.totalorder %s70, %s71
    %p83 = scmp.eq.s32.totalorder %s19, 1
    %p84 = por %p82, %p83
    %p86 = scmp.ne.s32.totalorder %s71, %s85
    %p87 = scmp.eq.s32.totalorder %s19, 0
    %p88 = por %p86, %p87
    %s90 = sadd.s32 %s89, 1
    %p93 = scmp.eq.s32.totalorder %s13, 1
    %p94 = scmp.ne.s32.totalorder %s89, %s91
    %p95 = scmp.eq.s32.totalorder %s13, 0
    %p96 = por %p94, %p95
    %p97 = scmp.ne.s32.totalorder %s89, %s91
    %p98 = scmp.eq.s32.totalorder %s18, 1
    %p99 = por %p97, %p98
    %p100 = scmp.ne.s32.totalorder %s91, %s92
    %p101 = scmp.eq.s32.totalorder %s18, 0
    %p102 = por %p100, %p101
    %p103 = scmp.ne.s32.totalorder %s91, %s92
    %p104 = scmp.eq.s32.totalorder %s19, 1
    %p105 = por %p103, %p104
    %p107 = scmp.ne.s32.totalorder %s92, %s106
    %p108 = scmp.eq.s32.totalorder %s19, 0
    %p109 = por %p107, %p108
    %s111 = sadd.s32 %s110, 1
    %p114 = scmp.eq.s32.totalorder %s13, 1
    %p115 = scmp.ne.s32.totalorder %s110, %s112
    %p116 = scmp.eq.s32.totalorder %s13, 0
    %p117 = por %p115, %p116
    %p118 = scmp.ne.s32.totalorder %s110, %s112
    %p119 = scmp.eq.s32.totalorder %s18, 1
    %p120 = por %p118, %p119
    %p121 = scmp.ne.s32.totalorder %s112, %s113
    %p122 = scmp.eq.s32.totalorder %s18, 0
    %p123 = por %p121, %p122
    %p124 = scmp.ne.s32.totalorder %s112, %s113
    %p125 = scmp.eq.s32.totalorder %s19, 1
    %p126 = por %p124, %p125
    %p128 = scmp.ne.s32.totalorder %s113, %s127
    %p129 = scmp.eq.s32.totalorder %s19, 0
    %p130 = por %p128, %p129
    %s131 = ssub.s32 %s13, %s20
    %p132 = scmp.eq.s32.totalorder %s131, 0
    %s134 = sadd.s32 %s133, 1
    %s135 = scalar_select %p132, %s133, %s134
    %p138 = pneg %p132
    %p139 = scmp.eq.s32.totalorder %s13, 1
    %p140 = por %p138, %p139
    %p141 = scmp.ne.s32.totalorder %s133, %s136
    %p142 = scmp.eq.s32.totalorder %s13, 0
    %p143 = por %p141, %p142
    %p144 = scmp.ne.s32.totalorder %s133, %s136
    %p145 = scmp.eq.s32.totalorder %s18, 1
    %p146 = por %p144, %p145
    %p147 = scmp.ne.s32.totalorder %s136, %s137
    %p148 = scmp.eq.s32.totalorder %s18, 0
    %p149 = por %p147, %p148
    %p150 = scmp.ne.s32.totalorder %s136, %s137
    %p151 = scmp.eq.s32.totalorder %s19, 1
    %p152 = por %p150, %p151
    %p154 = scmp.ne.s32.totalorder %s137, %s153
    %p155 = scmp.eq.s32.totalorder %s19, 0
    %p156 = por %p154, %p155
    %s157 = ssub.s32 %s13, %s20
    %p158 = scmp.eq.s32.totalorder %s157, 0
    %s160 = sadd.s32 %s159, 1
    %s161 = scalar_select %p158, %s159, %s160
    %p164 = pneg %p158
    %p165 = scmp.eq.s32.totalorder %s13, 1
    %p166 = por %p164, %p165
    %p167 = scmp.ne.s32.totalorder %s159, %s162
    %p168 = scmp.eq.s32.totalorder %s13, 0
    %p169 = por %p167, %p168
    %p170 = scmp.ne.s32.totalorder %s159, %s162
    %p171 = scmp.eq.s32.totalorder %s18, 1
    %p172 = por %p170, %p171
    %p173 = scmp.ne.s32.totalorder %s162, %s163
    %p174 = scmp.eq.s32.totalorder %s18, 0
    %p175 = por %p173, %p174
    %p176 = scmp.ne.s32.totalorder %s162, %s163
    %p177 = scmp.eq.s32.totalorder %s19, 1
    %p178 = por %p176, %p177
    %p180 = scmp.ne.s32.totalorder %s163, %s179
    %p181 = scmp.eq.s32.totalorder %s19, 0
    %p182 = por %p180, %p181
    %p183 = scmp.le.s32.totalorder 1, %s13
    %p184 = scmp.lt.s32.totalorder %s13, 3
    %p185 = pnand %p183, %p184
    %p186 = pneg %p185
    // Predicated region
    $region9: #{double_conv2d_forward.3} parent=5 // pred_check
      _
    $region10: #{double_conv2d_forward.3} parent=5 // pred_check_branch
      %188 = sbr.rel (%p185) target = $region12
    $region11: #{double_conv2d_forward.3} parent=5 // pred_region
      %s189 = ssub.s32 %s13, 1
      // Predicated region
      $region13: #{double_conv2d_forward.3} parent=11 // pred_check
        %p190 = pneg %p60
      $region14: #{double_conv2d_forward.3} parent=11 // pred_check_branch
        %192 = sbr.rel (%p190) target = $region16
      $region15: #{double_conv2d_forward.3} parent=11 // pred_region
        _
      $region16: #{double_conv2d_forward.3} parent=11 // pred_fallthru
        _
      // Predicated region
      $region17: #{double_conv2d_forward.3} parent=11 // pred_check
        %p193 = pneg %p81
      $region18: #{double_conv2d_forward.3} parent=11 // pred_check_branch
        %195 = sbr.rel (%p193) target = $region20
      $region19: #{double_conv2d_forward.3} parent=11 // pred_region
        _
      $region20: #{double_conv2d_forward.3} parent=11 // pred_fallthru
        _
      // Predicated region
      $region21: #{double_conv2d_forward.3} parent=11 // pred_check
        %p196 = pneg %p102
      $region22: #{double_conv2d_forward.3} parent=11 // pred_check_branch
        %198 = sbr.rel (%p196) target = $region24
      $region23: #{double_conv2d_forward.3} parent=11 // pred_region
        _
      $region24: #{double_conv2d_forward.3} parent=11 // pred_fallthru
        _
      // Predicated region
      $region25: #{double_conv2d_forward.3} parent=11 // pred_check
        %p199 = pneg %p123
      $region26: #{double_conv2d_forward.3} parent=11 // pred_check_branch
        %201 = sbr.rel (%p199) target = $region28
      $region27: #{double_conv2d_forward.3} parent=11 // pred_region
        _
      $region28: #{double_conv2d_forward.3} parent=11 // pred_fallthru
        _
    $region12: #{double_conv2d_forward.3} parent=5 // pred_fallthru
      _
    %p202 = scmp.lt.s32.totalorder %s13, 2
    // Predicated region
    $region29: #{double_conv2d_forward.3} parent=5 // pred_check
      %p203 = pneg %p202
    $region30: #{double_conv2d_forward.3} parent=5 // pred_check_branch
      %205 = sbr.rel (%p203) target = $region32
    $region31: #{double_conv2d_forward.3} parent=5 // pred_region
      // Predicated region
      $region33: #{double_conv2d_forward.3} parent=31 // pred_check
        %p206 = pneg %p33
      $region34: #{double_conv2d_forward.3} parent=31 // pred_check_branch
        %208 = sbr.rel (%p206) target = $region36
      $region35: #{double_conv2d_forward.3} parent=31 // pred_region
        %p209 = scmp.lt.s32.totalorder %s13, 1
        %s210 = scalar_select %p209, %s13, 1
        %s211 = smul.addr %s210, 2
        %s212 = smul.addr %s211, 8
        %s213 = scalar_lea.vmem %s0, %s212
      $region36: #{double_conv2d_forward.3} parent=31 // pred_fallthru
        _
    $region32: #{double_conv2d_forward.3} parent=5 // pred_fallthru
      _
    %p214 = scmp.le.s32.totalorder 1, %s13
    %p215 = scmp.lt.s32.totalorder %s13, 3
    %p216 = pnand %p214, %p215
    %p217 = pneg %p216
    // Predicated region
    $region37: #{double_conv2d_forward.3} parent=5 // pred_check
      _
    $region38: #{double_conv2d_forward.3} parent=5 // pred_check_branch
      %219 = sbr.rel (%p216) target = $region40
    $region39: #{double_conv2d_forward.3} parent=5 // pred_region
      %s220 = ssub.s32 %s13, 1
      %p221 = scmp.lt.s32.totalorder %s18, 1
      %s222 = scalar_select %p221, %s18, 1
      %s223 = smul.addr %s222, 2
      %s224 = smul.addr %s223, 8
      %s225 = scalar_lea.vmem %s0, %s224
      %p226 = pneg %p39
      %p227 = pneg %p36
      %p228 = pneg %p60
      %p229 = pneg %p57
      %p230 = pneg %p81
      %p231 = pneg %p78
      %p232 = pneg %p102
      %p233 = pneg %p99
      %p234 = pneg %p123
      %p235 = pneg %p120
      %p236 = pneg %p149
      %p237 = pneg %p146
      %p238 = scmp.lt.s32.totalorder %s18, 1
      %s239 = scalar_select %p238, %s18, 1
      %s240 = smul.addr %s239, 2
      %s241 = smul.addr %s240, 8
      %s242 = scalar_lea.vmem %s5, %s241
      %p243 = pneg %p175
      %p244 = pneg %p172
      %p245 = scmp.lt.s32.totalorder %s18, 1
      %s246 = scalar_select %p245, %s18, 1
      %s247 = smul.addr %s246, 2
      %s248 = scalar_lea.vmem %s6, %s247
      %p249 = scmp.lt.s32.totalorder %s18, 1
      %s250 = scalar_select %p249, %s18, 1
      %s251 = smul.addr %s250, 2
      %s252 = smul.addr %s251, 8
      %s253 = scalar_lea.vmem %s0, %s252
      %p254 = scmp.lt.s32.totalorder %s18, 1
      %s255 = scalar_select %p254, %s18, 1
      %s256 = smul.addr %s255, 2
      %s257 = smul.addr %s256, 8
      %s258 = scalar_lea.vmem %s5, %s257
      %p259 = scmp.lt.s32.totalorder %s18, 1
      %s260 = scalar_select %p259, %s18, 1
      %s261 = smul.addr %s260, 2
      %s262 = scalar_lea.vmem %s6, %s261
      %v263 = vld [vmem:[%s253] sm:$0xff]
      %v264 = vld [vmem:[%s253 + $0x8] sm:$0xff]
      %vm267 = vcmask 1040384
      %v268 = vrot.slane %v263, 7
      %v269 = vrot.slane %v264, 7
      %v270 = vsel %vm267, %v268, %v269
      %v272 = vsel %vm267, 0.0, %v268
      %vm273 = vcmask 1046528
      %v274 = vrot.slane %v263, 1
      %v275 = vrot.slane %v264, 1
      %v276 = vsel %vm273, %v274, %v275
      %v278 = vsel %vm273, %v275, 0.0
      %v279 = vld [vmem:[%s1] sm:$0xff]
      %v280 = vld [vmem:[%s1 + $0x8] sm:$0xff]
      %v281 = vld [vmem:[%s1 + $0x10] sm:$0xff]
      %v282 = vld [vmem:[%s1 + $0x18] sm:$0xff]
      %v283 = vld [vmem:[%s1 + $0x20] sm:$0xff]
      %v284 = vld [vmem:[%s1 + $0x28] sm:$0xff]
      %v285 = vld [vmem:[%s1 + $0x30] sm:$0xff]
      %v286 = vld [vmem:[%s1 + $0x38] sm:$0xff]
      %s287 = scalar_lea.vmem %s1, 64
      %v288 = vld [vmem:[%s287] sm:$0xff]
      %v289 = vld [vmem:[%s287 + $0x8] sm:$0xff]
      %v290 = vld [vmem:[%s287 + $0x10] sm:$0xff]
      %v291 = vld [vmem:[%s287 + $0x18] sm:$0xff]
      %v292 = vld [vmem:[%s287 + $0x20] sm:$0xff]
      %v293 = vld [vmem:[%s287 + $0x28] sm:$0xff]
      %v294 = vld [vmem:[%s287 + $0x30] sm:$0xff]
      %v295 = vld [vmem:[%s287 + $0x38] sm:$0xff]
      %vm296 = vcmask 523264
      %v297 = vsel %vm296, %v263, 0
      %v299 = vsel %vm296, %v264, 0
      %301 = vmatprep.subr.mxu0 0.0
      %302 = vmatpush1.msra.mxu0 %v288
      %303 = vmatprep.subr.mxu0 0.0
      %304 = vmatpush1.msra.mxu0 %v289
      %305 = vmatprep.subr.mxu0 0.0
      %306 = vmatpush1.msra.mxu0 %v290
      %307 = vmatprep.subr.mxu0 0.0
      %308 = vmatpush1.msra.mxu0 %v291
      %309 = vmatprep.subr.mxu0 0.0
      %310 = vmatpush1.msra.mxu0 %v292
      %311 = vmatprep.subr.mxu0 0.0
      %312 = vmatpush1.msra.mxu0 %v293
      %313 = vmatprep.subr.mxu0 0.0
      %314 = vmatpush1.msra.mxu0 %v294
      %315 = vmatprep.subr.mxu0 0.0
      %316 = vmatpush1.msra.mxu0 %v295
      %317 = vmatprep.subr.mxu0 0.0
      %318 = vmatpush1.msra.mxu0 0.0
      %319 = vmatprep.subr.mxu0 0.0
      %320 = vmatpush1.msra.mxu0 0.0
      %321 = vmatprep.subr.mxu0 0.0
      %322 = vmatpush1.msra.mxu0 0.0
      %323 = vmatprep.subr.mxu0 0.0
      %324 = vmatpush1.msra.mxu0 0.0
      %325 = vmatprep.subr.mxu0 0.0
      %326 = vmatpush1.msra.mxu0 0.0
      %327 = vmatprep.subr.mxu0 0.0
      %328 = vmatpush1.msra.mxu0 0.0
      %329 = vmatprep.subr.mxu0 0.0
      %330 = vmatpush1.msra.mxu0 0.0
      %331 = vmatprep.subr.mxu0 0.0
      %332 = vmatpush1.msra.mxu0 0.0
      %333 = vmatprep.subr.mxu0 0.0
      %334 = vmatpush1.msra.mxu0 0.0
      %335 = vmatprep.subr.mxu0 0.0
      %336 = vmatpush1.msra.mxu0 0.0
      %337 = vmatprep.subr.mxu0 0.0
      %338 = vmatpush1.msra.mxu0 0.0
      %339 = vmatprep.subr.mxu0 0.0
      %340 = vmatpush1.msra.mxu0 0.0
      %341 = vmatprep.subr.mxu0 0.0
      %342 = vmatpush1.msra.mxu0 0.0
      %343 = vmatprep.subr.mxu0 0.0
      %344 = vmatpush1.msra.mxu0 0.0
      %345 = vmatprep.subr.mxu0 0.0
      %346 = vmatpush1.msra.mxu0 0.0
      %347 = vmatprep.subr.mxu0 0.0
      %348 = vmatpush1.msra.mxu0 0.0
      %349 = vmatprep.subr.mxu0 0.0
      %350 = vmatpush1.msra.mxu0 0.0
      %351 = vmatprep.subr.mxu0 0.0
      %352 = vmatpush1.msra.mxu0 0.0
      %353 = vmatprep.subr.mxu0 0.0
      %354 = vmatpush1.msra.mxu0 0.0
      %355 = vmatprep.subr.mxu0 0.0
      %356 = vmatpush1.msra.mxu0 0.0
      %357 = vmatprep.subr.mxu0 0.0
      %358 = vmatpush1.msra.mxu0 0.0
      %359 = vmatprep.subr.mxu0 0.0
      %360 = vmatpush1.msra.mxu0 0.0
      %361 = vmatprep.subr.mxu0 0.0
      %362 = vmatpush1.msra.mxu0 0.0
      %363 = vmatprep.subr.mxu0 0.0
      %364 = vmatpush1.msra.mxu0 0.0
      %365 = vmatprep.mubr.f32.mxu0 0.0
      %366 = vmatmul.mubr.f32.gmra.mrb[0].mxu0 %v297
      %v367 = vpop.f32.mrb[0].mxu0
      %v368 = vadd.f32 0.0, %v367
      %v369 = vpop.f32.mrb[0].mxu0
      %370 = vmatprep.mubr.f32.mxu0 0.0
      %371 = vmatmul.mubr.f32.gmra.mrb[0].mxu0 %v299
      %v372 = vpop.f32.mrb[0].mxu0
      %v373 = vadd.f32 0.0, %v372
      %v374 = vpop.f32.mrb[0].mxu0
      %375 = vdwg.mxu0
      %v377 = vsel %vm296, %v272, 0
      %v379 = vsel %vm296, %v270, 0
      %381 = vmatprep.subr.mxu0 0.0
      %382 = vmatpush1.msra.mxu0 %v279
      %383 = vmatprep.subr.mxu0 0.0
      %384 = vmatpush1.msra.mxu0 %v280
      %385 = vmatprep.subr.mxu0 0.0
      %386 = vmatpush1.msra.mxu0 %v281
      %387 = vmatprep.subr.mxu0 0.0
      %388 = vmatpush1.msra.mxu0 %v282
      %389 = vmatprep.subr.mxu0 0.0
      %390 = vmatpush1.msra.mxu0 %v283
      %391 = vmatprep.subr.mxu0 0.0
      %392 = vmatpush1.msra.mxu0 %v284
      %393 = vmatprep.subr.mxu0 0.0
      %394 = vmatpush1.msra.mxu0 %v285
      %395 = vmatprep.subr.mxu0 0.0
      %396 = vmatpush1.msra.mxu0 %v286
      %397 = vmatprep.subr.mxu0 0.0
      %398 = vmatpush1.msra.mxu0 0.0
      %399 = vmatprep.subr.mxu0 0.0
      %400 = vmatpush1.msra.mxu0 0.0
      %401 = vmatprep.subr.mxu0 0.0
      %402 = vmatpush1.msra.mxu0 0.0
      %403 = vmatprep.subr.mxu0 0.0
      %404 = vmatpush1.msra.mxu0 0.0
      %405 = vmatprep.subr.mxu0 0.0
      %406 = vmatpush1.msra.mxu0 0.0
      %407 = vmatprep.subr.mxu0 0.0
      %408 = vmatpush1.msra.mxu0 0.0
      %409 = vmatprep.subr.mxu0 0.0
      %410 = vmatpush1.msra.mxu0 0.0
      %411 = vmatprep.subr.mxu0 0.0
      %412 = vmatpush1.msra.mxu0 0.0
      %413 = vmatprep.subr.mxu0 0.0
      %414 = vmatpush1.msra.mxu0 0.0
      %415 = vmatprep.subr.mxu0 0.0
      %416 = vmatpush1.msra.mxu0 0.0
      %417 = vmatprep.subr.mxu0 0.0
      %418 = vmatpush1.msra.mxu0 0.0
      %419 = vmatprep.subr.mxu0 0.0
      %420 = vmatpush1.msra.mxu0 0.0
      %421 = vmatprep.subr.mxu0 0.0
      %422 = vmatpush1.msra.mxu0 0.0
      %423 = vmatprep.subr.mxu0 0.0
      %424 = vmatpush1.msra.mxu0 0.0
      %425 = vmatprep.subr.mxu0 0.0
      %426 = vmatpush1.msra.mxu0 0.0
      %427 = vmatprep.subr.mxu0 0.0
      %428 = vmatpush1.msra.mxu0 0.0
      %429 = vmatprep.subr.mxu0 0.0
      %430 = vmatpush1.msra.mxu0 0.0
      %431 = vmatprep.subr.mxu0 0.0
      %432 = vmatpush1.msra.mxu0 0.0
      %433 = vmatprep.subr.mxu0 0.0
      %434 = vmatpush1.msra.mxu0 0.0
      %435 = vmatprep.subr.mxu0 0.0
      %436 = vmatpush1.msra.mxu0 0.0
      %437 = vmatprep.subr.mxu0 0.0
      %438 = vmatpush1.msra.mxu0 0.0
      %439 = vmatprep.subr.mxu0 0.0
      %440 = vmatpush1.msra.mxu0 0.0
      %441 = vmatprep.subr.mxu0 0.0
      %442 = vmatpush1.msra.mxu0 0.0
      %443 = vmatprep.subr.mxu0 0.0
      %444 = vmatpush1.msra.mxu0 0.0
      %445 = vmatprep.mubr.f32.mxu0 0.0
      %446 = vmatmul.mubr.f32.gmra.mrb[0].mxu0 %v377
      %v447 = vpop.f32.mrb[0].mxu0
      %v448 = vadd.f32 %v368, %v447
      %v449 = vpop.f32.mrb[0].mxu0
      %450 = vmatprep.mubr.f32.mxu0 0.0
      %451 = vmatmul.mubr.f32.gmra.mrb[0].mxu0 %v379
      %v452 = vpop.f32.mrb[0].mxu0
      %v453 = vadd.f32 %v373, %v452
      %v454 = vpop.f32.mrb[0].mxu0
      %455 = vdwg.mxu0
      %s456 = scalar_lea.vmem %s1, 128
      %v457 = vld [vmem:[%s456] sm:$0xff]
      %v458 = vld [vmem:[%s456 + $0x8] sm:$0xff]
      %v459 = vld [vmem:[%s456 + $0x10] sm:$0xff]
      %v460 = vld [vmem:[%s456 + $0x18] sm:$0xff]
      %v461 = vld [vmem:[%s456 + $0x20] sm:$0xff]
      %v462 = vld [vmem:[%s456 + $0x28] sm:$0xff]
      %v463 = vld [vmem:[%s456 + $0x30] sm:$0xff]
      %v464 = vld [vmem:[%s456 + $0x38] sm:$0xff]
      %v465 = vsel %vm296, %v276, 0
      %v468 = vsel %vm296, %v278, 0
      %470 = vmatprep.subr.mxu0 0.0
      %471 = vmatpush1.msra.mxu0 %v457
      %472 = vmatprep.subr.mxu0 0.0
      %473 = vmatpush1.msra.mxu0 %v458
      %474 = vmatprep.subr.mxu0 0.0
      %475 = vmatpush1.msra.mxu0 %v459
      %476 = vmatprep.subr.mxu0 0.0
      %477 = vmatpush1.msra.mxu0 %v460
      %478 = vmatprep.subr.mxu0 0.0
      %479 = vmatpush1.msra.mxu0 %v461
      %480 = vmatprep.subr.mxu0 0.0
      %481 = vmatpush1.msra.mxu0 %v462
      %482 = vmatprep.subr.mxu0 0.0
      %483 = vmatpush1.msra.mxu0 %v463
      %484 = vmatprep.subr.mxu0 0.0
      %485 = vmatpush1.msra.mxu0 %v464
      %486 = vmatprep.subr.mxu0 0.0
      %487 = vmatpush1.msra.mxu0 0.0
      %488 = vmatprep.subr.mxu0 0.0
      %489 = vmatpush1.msra.mxu0 0.0
      %490 = vmatprep.subr.mxu0 0.0
      %491 = vmatpush1.msra.mxu0 0.0
      %492 = vmatprep.subr.mxu0 0.0
      %493 = vmatpush1.msra.mxu0 0.0
      %494 = vmatprep.subr.mxu0 0.0
      %495 = vmatpush1.msra.mxu0 0.0
      %496 = vmatprep.subr.mxu0 0.0
      %497 = vmatpush1.msra.mxu0 0.0
      %498 = vmatprep.subr.mxu0 0.0
      %499 = vmatpush1.msra.mxu0 0.0
      %500 = vmatprep.subr.mxu0 0.0
      %501 = vmatpush1.msra.mxu0 0.0
      %502 = vmatprep.subr.mxu0 0.0
      %503 = vmatpush1.msra.mxu0 0.0
      %504 = vmatprep.subr.mxu0 0.0
      %505 = vmatpush1.msra.mxu0 0.0
      %506 = vmatprep.subr.mxu0 0.0
      %507 = vmatpush1.msra.mxu0 0.0
      %508 = vmatprep.subr.mxu0 0.0
      %509 = vmatpush1.msra.mxu0 0.0
      %510 = vmatprep.subr.mxu0 0.0
      %511 = vmatpush1.msra.mxu0 0.0
      %512 = vmatprep.subr.mxu0 0.0
      %513 = vmatpush1.msra.mxu0 0.0
      %514 = vmatprep.subr.mxu0 0.0
      %515 = vmatpush1.msra.mxu0 0.0
      %516 = vmatprep.subr.mxu0 0.0
      %517 = vmatpush1.msra.mxu0 0.0
      %518 = vmatprep.subr.mxu0 0.0
      %519 = vmatpush1.msra.mxu0 0.0
      %520 = vmatprep.subr.mxu0 0.0
      %521 = vmatpush1.msra.mxu0 0.0
      %522 = vmatprep.subr.mxu0 0.0
      %523 = vmatpush1.msra.mxu0 0.0
      %524 = vmatprep.subr.mxu0 0.0
      %525 = vmatpush1.msra.mxu0 0.0
      %526 = vmatprep.subr.mxu0 0.0
      %527 = vmatpush1.msra.mxu0 0.0
      %528 = vmatprep.subr.mxu0 0.0
      %529 = vmatpush1.msra.mxu0 0.0
      %530 = vmatprep.subr.mxu0 0.0
      %531 = vmatpush1.msra.mxu0 0.0
      %532 = vmatprep.subr.mxu0 0.0
      %533 = vmatpush1.msra.mxu0 0.0
      %534 = vmatprep.mubr.f32.mxu0 0.0
      %535 = vmatmul.mubr.f32.gmra.mrb[0].mxu0 %v465
      %v536 = vpop.f32.mrb[0].mxu0
      %v537 = vadd.f32 0.0, %v536
      %v538 = vpop.f32.mrb[0].mxu0
      %539 = vmatprep.mubr.f32.mxu0 0.0
      %540 = vmatmul.mubr.f32.gmra.mrb[0].mxu0 %v468
      %v541 = vpop.f32.mrb[0].mxu0
      %v542 = vadd.f32 0.0, %v541
      %v543 = vpop.f32.mrb[0].mxu0
      %544 = vdwg.mxu0
      %v545 = vadd.f32 %v448, %v537
      %v546 = vadd.f32 %v453, %v542
      %547 = vst [vmem:[%s258] sm:$0xff] %v545
      %548 = vst [vmem:[%s258 + $0x8] sm:$0xff] %v546
      %v549 = vld [vmem:[%s4] sm:$0xff]
      %v550 = vld [vmem:[%s4 + $0x8] sm:$0xff]
      %v551 = vld [vmem:[%s4 + $0x10] sm:$0xff]
      %v552 = vld [vmem:[%s4 + $0x18] sm:$0xff]
      %v553 = vld [vmem:[%s4 + $0x20] sm:$0xff]
      %v554 = vld [vmem:[%s4 + $0x28] sm:$0xff]
      %v555 = vld [vmem:[%s4 + $0x30] sm:$0xff]
      %v556 = vld [vmem:[%s4 + $0x38] sm:$0xff]
      %v557 = vld [vmem:[%s4 + $0x40] sm:$0xff]
      %v558 = vld [vmem:[%s4 + $0x48] sm:$0xff]
      %v559 = vld [vmem:[%s4 + $0x50] sm:$0xff]
      %v560 = vld [vmem:[%s4 + $0x58] sm:$0xff]
      %v561 = vld [vmem:[%s4 + $0x60] sm:$0xff]
      %v562 = vld [vmem:[%s4 + $0x68] sm:$0xff]
      %v563 = vld [vmem:[%s4 + $0x70] sm:$0xff]
      %v564 = vld [vmem:[%s4 + $0x78] sm:$0xff]
      %565 = vmatprep.subr.mxu0 0.0
      %566 = vmatpush1.msra.mxu0 %v549
      %567 = vmatprep.subr.mxu0 0.0
      %568 = vmatpush1.msra.mxu0 %v550
      %569 = vmatprep.subr.mxu0 0.0
      %570 = vmatpush1.msra.mxu0 %v551
      %571 = vmatprep.subr.mxu0 0.0
      %572 = vmatpush1.msra.mxu0 %v552
      %573 = vmatprep.subr.mxu0 0.0
      %574 = vmatpush1.msra.mxu0 %v553
      %575 = vmatprep.subr.mxu0 0.0
      %576 = vmatpush1.msra.mxu0 %v554
      %577 = vmatprep.subr.mxu0 0.0
      %578 = vmatpush1.msra.mxu0 %v555
      %579 = vmatprep.subr.mxu0 0.0
      %580 = vmatpush1.msra.mxu0 %v556
      %581 = vmatprep.subr.mxu0 0.0
      %582 = vmatpush1.msra.mxu0 %v557
      %583 = vmatprep.subr.mxu0 0.0
      %584 = vmatpush1.msra.mxu0 %v558
      %585 = vmatprep.subr.mxu0 0.0
      %586 = vmatpush1.msra.mxu0 %v559
      %587 = vmatprep.subr.mxu0 0.0
      %588 = vmatpush1.msra.mxu0 %v560
      %589 = vmatprep.subr.mxu0 0.0
      %590 = vmatpush1.msra.mxu0 %v561
      %591 = vmatprep.subr.mxu0 0.0
      %592 = vmatpush1.msra.mxu0 %v562
      %593 = vmatprep.subr.mxu0 0.0
      %594 = vmatpush1.msra.mxu0 %v563
      %595 = vmatprep.subr.mxu0 0.0
      %596 = vmatpush1.msra.mxu0 %v564
      %597 = vmatprep.subr.mxu0 0.0
      %598 = vmatpush1.msra.mxu0 0.0
      %599 = vmatprep.subr.mxu0 0.0
      %600 = vmatpush1.msra.mxu0 0.0
      %601 = vmatprep.subr.mxu0 0.0
      %602 = vmatpush1.msra.mxu0 0.0
      %603 = vmatprep.subr.mxu0 0.0
      %604 = vmatpush1.msra.mxu0 0.0
      %605 = vmatprep.subr.mxu0 0.0
      %606 = vmatpush1.msra.mxu0 0.0
      %607 = vmatprep.subr.mxu0 0.0
      %608 = vmatpush1.msra.mxu0 0.0
      %609 = vmatprep.subr.mxu0 0.0
      %610 = vmatpush1.msra.mxu0 0.0
      %611 = vmatprep.subr.mxu0 0.0
      %612 = vmatpush1.msra.mxu0 0.0
      %613 = vmatprep.subr.mxu0 0.0
      %614 = vmatpush1.msra.mxu0 0.0
      %615 = vmatprep.subr.mxu0 0.0
      %616 = vmatpush1.msra.mxu0 0.0
      %617 = vmatprep.subr.mxu0 0.0
      %618 = vmatpush1.msra.mxu0 0.0
      %619 = vmatprep.subr.mxu0 0.0
      %620 = vmatpush1.msra.mxu0 0.0
      %621 = vmatprep.subr.mxu0 0.0
      %622 = vmatpush1.msra.mxu0 0.0
      %623 = vmatprep.subr.mxu0 0.0
      %624 = vmatpush1.msra.mxu0 0.0
      %625 = vmatprep.subr.mxu0 0.0
      %626 = vmatpush1.msra.mxu0 0.0
      %627 = vmatprep.subr.mxu0 0.0
      %628 = vmatpush1.msra.mxu0 0.0
      %629 = vmatprep.mubr.f32.mxu0 0.0
      %630 = vmatmul.mubr.f32.gmra.mrb[0].mxu0 %v545
      %v631 = vpop.f32.mrb[0].mxu0
      %v632 = vadd.f32 0.0, %v631
      %v633 = vpop.f32.mrb[0].mxu0
      %634 = vmatprep.mubr.f32.mxu0 0.0
      %635 = vmatmul.mubr.f32.gmra.mrb[0].mxu0 %v546
      %v636 = vpop.f32.mrb[0].mxu0
      %v637 = vadd.f32 0.0, %v636
      %v638 = vpop.f32.mrb[0].mxu0
      %639 = vdwg.mxu0
      %vm640 = vcmask 64512
      %v641 = vsel %vm640, %v632, 0.0
      %v642 = vsel %vm640, %v637, 0.0
      %v643 = vadd.f32 %v641, %v642
      %v644 = vrot.slane %v643, 4
      %v645 = vadd.f32 %v643, %v644
      %v646 = vrot.slane %v645, 2
      %v647 = vadd.f32 %v645, %v646
      %v648 = vrot.slane %v647, 1
      %v649 = vadd.f32 %v647, %v648
      %v650 = vmul.f32 %v545, %v545
      %v651 = vmul.f32 %v546, %v546
      %652 = vmatprep.subr.mxu0 0.0
      %653 = vmatpush1.msra.mxu0 %v549
      %654 = vmatprep.subr.mxu0 0.0
      %655 = vmatpush1.msra.mxu0 %v550
      %656 = vmatprep.subr.mxu0 0.0
      %657 = vmatpush1.msra.mxu0 %v551
      %658 = vmatprep.subr.mxu0 0.0
      %659 = vmatpush1.msra.mxu0 %v552
      %660 = vmatprep.subr.mxu0 0.0
      %661 = vmatpush1.msra.mxu0 %v553
      %662 = vmatprep.subr.mxu0 0.0
      %663 = vmatpush1.msra.mxu0 %v554
      %664 = vmatprep.subr.mxu0 0.0
      %665 = vmatpush1.msra.mxu0 %v555
      %666 = vmatprep.subr.mxu0 0.0
      %667 = vmatpush1.msra.mxu0 %v556
      %668 = vmatprep.subr.mxu0 0.0
      %669 = vmatpush1.msra.mxu0 %v557
      %670 = vmatprep.subr.mxu0 0.0
      %671 = vmatpush1.msra.mxu0 %v558
      %672 = vmatprep.subr.mxu0 0.0
      %673 = vmatpush1.msra.mxu0 %v559
      %674 = vmatprep.subr.mxu0 0.0
      %675 = vmatpush1.msra.mxu0 %v560
      %676 = vmatprep.subr.mxu0 0.0
      %677 = vmatpush1.msra.mxu0 %v561
      %678 = vmatprep.subr.mxu0 0.0
      %679 = vmatpush1.msra.mxu0 %v562
      %680 = vmatprep.subr.mxu0 0.0
      %681 = vmatpush1.msra.mxu0 %v563
      %682 = vmatprep.subr.mxu0 0.0
      %683 = vmatpush1.msra.mxu0 %v564
      %684 = vmatprep.subr.mxu0 0.0
      %685 = vmatpush1.msra.mxu0 0.0
      %686 = vmatprep.subr.mxu0 0.0
      %687 = vmatpush1.msra.mxu0 0.0
      %688 = vmatprep.subr.mxu0 0.0
      %689 = vmatpush1.msra.mxu0 0.0
      %690 = vmatprep.subr.mxu0 0.0
      %691 = vmatpush1.msra.mxu0 0.0
      %692 = vmatprep.subr.mxu0 0.0
      %693 = vmatpush1.msra.mxu0 0.0
      %694 = vmatprep.subr.mxu0 0.0
      %695 = vmatpush1.msra.mxu0 0.0
      %696 = vmatprep.subr.mxu0 0.0
      %697 = vmatpush1.msra.mxu0 0.0
      %698 = vmatprep.subr.mxu0 0.0
      %699 = vmatpush1.msra.mxu0 0.0
      %700 = vmatprep.subr.mxu0 0.0
      %701 = vmatpush1.msra.mxu0 0.0
      %702 = vmatprep.subr.mxu0 0.0
      %703 = vmatpush1.msra.mxu0 0.0
      %704 = vmatprep.subr.mxu0 0.0
      %705 = vmatpush1.msra.mxu0 0.0
      %706 = vmatprep.subr.mxu0 0.0
      %707 = vmatpush1.msra.mxu0 0.0
      %708 = vmatprep.subr.mxu0 0.0
      %709 = vmatpush1.msra.mxu0 0.0
      %710 = vmatprep.subr.mxu0 0.0
      %711 = vmatpush1.msra.mxu0 0.0
      %712 = vmatprep.subr.mxu0 0.0
      %713 = vmatpush1.msra.mxu0 0.0
      %714 = vmatprep.subr.mxu0 0.0
      %715 = vmatpush1.msra.mxu0 0.0
      %716 = vmatprep.mubr.f32.mxu0 0.0
      %717 = vmatmul.mubr.f32.gmra.mrb[0].mxu0 %v650
      %v718 = vpop.f32.mrb[0].mxu0
      %v719 = vadd.f32 0.0, %v718
      %v720 = vpop.f32.mrb[0].mxu0
      %721 = vmatprep.mubr.f32.mxu0 0.0
      %722 = vmatmul.mubr.f32.gmra.mrb[0].mxu0 %v651
      %v723 = vpop.f32.mrb[0].mxu0
      %v724 = vadd.f32 0.0, %v723
      %v725 = vpop.f32.mrb[0].mxu0
      %726 = vdwg.mxu0
      %v727 = vsel %vm640, %v719, 0.0
      %v728 = vsel %vm640, %v724, 0.0
      %v729 = vadd.f32 %v727, %v728
      %v730 = vrot.slane %v729, 4
      %v731 = vadd.f32 %v729, %v730
      %v732 = vrot.slane %v731, 2
      %v733 = vadd.f32 %v731, %v732
      %v734 = vrot.slane %v733, 1
      %v735 = vadd.f32 %v733, %v734
      %v736 = vsel %vm267, %v649, %v735
      %vm737 = vcmask 58368
      %738 = vst.msk [vmem:[%s262] sm:$0x3] %vm737, %v736
      %p739 = scmp.lt.s32.totalorder %s18, 1
      %s740 = scalar_select %p739, %s18, 1
      %s741 = smul.addr %s740, 2
      %s742 = smul.addr %s741, 8
      %s743 = scalar_lea.vmem %s5, %s742
      %p744 = scmp.lt.s32.totalorder %s18, 1
      %s745 = scalar_select %p744, %s18, 1
      %s746 = smul.addr %s745, 2
      %s747 = scalar_lea.vmem %s6, %s746
      // Predicated region
      $region41: #{double_conv2d_forward.3} parent=39 // pred_check
        %p748 = pneg %p146
      $region42: #{double_conv2d_forward.3} parent=39 // pred_check_branch
        %750 = sbr.rel (%p748) target = $region44
      $region43: #{double_conv2d_forward.3} parent=39 // pred_region
        _
      $region44: #{double_conv2d_forward.3} parent=39 // pred_fallthru
        _
      // Predicated region
      $region45: #{double_conv2d_forward.3} parent=39 // pred_check
        %p751 = pneg %p172
      $region46: #{double_conv2d_forward.3} parent=39 // pred_check_branch
        %753 = sbr.rel (%p751) target = $region48
      $region47: #{double_conv2d_forward.3} parent=39 // pred_region
        _
      $region48: #{double_conv2d_forward.3} parent=39 // pred_fallthru
        _
    $region40: #{double_conv2d_forward.3} parent=5 // pred_fallthru
      _
    %p754 = scmp.le.s32.totalorder 2, %s13
    // Predicated region
    $region49: #{double_conv2d_forward.3} parent=5 // pred_check
      %p755 = pneg %p754
    $region50: #{double_conv2d_forward.3} parent=5 // pred_check_branch
      %757 = sbr.rel (%p755) target = $region52
    $region51: #{double_conv2d_forward.3} parent=5 // pred_region
      %s758 = ssub.s32 %s13, 2
      // Predicated region
      $region53: #{double_conv2d_forward.3} parent=51 // pred_check
        %p759 = pneg %p152
      $region54: #{double_conv2d_forward.3} parent=51 // pred_check_branch
        %761 = sbr.rel (%p759) target = $region56
      $region55: #{double_conv2d_forward.3} parent=51 // pred_region
        %p762 = scmp.lt.s32.totalorder %s19, 1
        %s763 = scalar_select %p762, %s19, 1
        %s764 = smul.addr %s763, 2
        %s765 = smul.addr %s764, 8
        %s766 = scalar_lea.vmem %s5, %s765
      $region56: #{double_conv2d_forward.3} parent=51 // pred_fallthru
        _
      // Predicated region
      $region57: #{double_conv2d_forward.3} parent=51 // pred_check
        %p767 = pneg %p178
      $region58: #{double_conv2d_forward.3} parent=51 // pred_check_branch
        %769 = sbr.rel (%p767) target = $region60
      $region59: #{double_conv2d_forward.3} parent=51 // pred_region
        %p770 = scmp.lt.s32.totalorder %s19, 1
        %s771 = scalar_select %p770, %s19, 1
        %s772 = smul.addr %s771, 2
        %s773 = scalar_lea.vmem %s6, %s772
      $region60: #{double_conv2d_forward.3} parent=51 // pred_fallthru
        _
    $region52: #{double_conv2d_forward.3} parent=5 // pred_fallthru
      _
  $region6: #{double_conv2d_forward.3} parent=0 // loop_footer
    %s17 = sadd.s32 1, %s13
  $region7: #{double_conv2d_forward.3} parent=0 // loop_footer_branch
    %12 = sbr.rel target = $region3
  $region8: #{double_conv2d_forward.3} parent=0 // loop_exit
    _

// kernel: tile.43
$region0: #{tile.43}
  #allocation0 [shape = 's32[1]{0}', space=sflag, size = 0x4, scoped, tag = 'scoped memory for tile.43']
  %s0 = inlined_call_operand.vmem [shape: f32[8], index: 0, kind: input, shape index: {}]
  %s1 = inlined_call_operand.vmem [shape: f32[16,8], index: 1, kind: output, shape index: {}]
  // Predicated region
  $region2: #{tile.43} parent=0 // pred_check
    _
  $region3: #{tile.43} parent=0 // pred_check_branch
    %3 = sbr.rel (0) target = $region5
  $region4: #{tile.43} parent=0 // pred_region
    _
  $region5: #{tile.43} parent=0 // pred_fallthru
    _
  %v4 = vld [vmem:[%s0] ss:$0 sm:$0xff]
  %5 = vst [vmem:[%s1] sm:$0xff] %v4
  %s6 = scalar_lea.vmem %s1, 8
  %7 = vst [vmem:[%s6] sm:$0xff] %v4

// kernel: tile.44
$region0: #{tile.44}
  %s0 = inlined_call_operand.vmem [shape: f32[16,8], index: 0, kind: input, shape index: {}]
  %s1 = inlined_call_operand.vmem [shape: f32[1,128], index: 1, kind: output, shape index: {}]
  $region1: #{tile.44} parent=0
    #allocation0 [shape = 'u8[4096]{0}', space=vmem, size = 0x1000, scoped, tag = 'scoped mem for output reshape']
    %v2 = vld [vmem:[%s0] sm:$0x1]
    %vm3 = vcmask 64512
    %4 = vst.msk [vmem:[#allocation0] sm:$0x1] %vm3, %v2
    %s5 = scalar_lea.vmem %s0, 15
    %v6 = vld [vmem:[%s5] sm:$0x1]
    %7 = vrot.lane.b32.xlu0 %v6, 120
    %v8 = vpop.permute.xlu0 %7
    %vm9 = vcmask 1048512
    %10 = vst.msk [vmem:[#allocation0] sm:$0x1] %vm9, %v8
    %s11 = scalar_lea.vmem %s0, 14
    %v12 = vld [vmem:[%s11] sm:$0x1]
    %13 = vrot.lane.b32.xlu0 %v12, 112
    %v14 = vpop.permute.xlu0 %13
    %vm15 = vcmask 982912
    %16 = vst.msk [vmem:[#allocation0] sm:$0x1] %vm15, %v14
    %s17 = scalar_lea.vmem %s0, 13
    %v18 = vld [vmem:[%s17] sm:$0x1]
    %19 = vrot.lane.b32.xlu0 %v18, 104
    %v20 = vpop.permute.xlu0 %19
    %vm21 = vcmask 917312
    %22 = vst.msk [vmem:[#allocation0] sm:$0x1] %vm21, %v20
    %s23 = scalar_lea.vmem %s0, 12
    %v24 = vld [vmem:[%s23] sm:$0x1]
    %25 = vrot.lane.b32.xlu0 %v24, 96
    %v26 = vpop.permute.xlu0 %25
    %vm27 = vcmask 851712
    %28 = vst.msk [vmem:[#allocation0] sm:$0x1] %vm27, %v26
    %s29 = scalar_lea.vmem %s0, 11
    %v30 = vld [vmem:[%s29] sm:$0x1]
    %31 = vrot.lane.b32.xlu0 %v30, 88
    %v32 = vpop.permute.xlu0 %31
    %vm33 = vcmask 786112
    %34 = vst.msk [vmem:[#allocation0] sm:$0x1] %vm33, %v32
    %s35 = scalar_lea.vmem %s0, 10
    %v36 = vld [vmem:[%s35] sm:$0x1]
    %37 = vrot.lane.b32.xlu0 %v36, 80
    %v38 = vpop.permute.xlu0 %37
    %vm39 = vcmask 720512
    %40 = vst.msk [vmem:[#allocation0] sm:$0x1] %vm39, %v38
    %s41 = scalar_lea.vmem %s0, 9
    %v42 = vld [vmem:[%s41] sm:$0x1]
    %43 = vrot.lane.b32.xlu0 %v42, 72
    %v44 = vpop.permute.xlu0 %43
    %vm45 = vcmask 654912
    %46 = vst.msk [vmem:[#allocation0] sm:$0x1] %vm45, %v44
    %s47 = scalar_lea.vmem %s0, 8
    %v48 = vld [vmem:[%s47] sm:$0x1]
    %49 = vrot.lane.b32.xlu0 %v48, 64
    %v50 = vpop.permute.xlu0 %49
    %vm51 = vcmask 589312
    %52 = vst.msk [vmem:[#allocation0] sm:$0x1] %vm51, %v50
    %s53 = scalar_lea.vmem %s0, 7
    %v54 = vld [vmem:[%s53] sm:$0x1]
    %55 = vrot.lane.b32.xlu0 %v54, 56
    %v56 = vpop.permute.xlu0 %55
    %vm57 = vcmask 523712
    %58 = vst.msk [vmem:[#allocation0] sm:$0x1] %vm57, %v56
    %s59 = scalar_lea.vmem %s0, 6
    %v60 = vld [vmem:[%s59] sm:$0x1]
    %61 = vrot.lane.b32.xlu0 %v60, 48
    %v62 = vpop.permute.xlu0 %61
    %vm63 = vcmask 458112
    %64 = vst.msk [vmem:[#allocation0] sm:$0x1] %vm63, %v62
    %s65 = scalar_lea.vmem %s0, 5
    %v66 = vld [vmem:[%s65] sm:$0x1]
    %67 = vrot.lane.b32.xlu0 %v66, 40
    %v68 = vpop.permute.xlu0 %67
    %vm69 = vcmask 392512
    %70 = vst.msk [vmem:[#allocation0] sm:$0x1] %vm69, %v68
    %s71 = scalar_lea.vmem %s0, 4
    %v72 = vld [vmem:[%s71] sm:$0x1]
    %73 = vrot.lane.b32.xlu0 %v72, 32
    %v74 = vpop.permute.xlu0 %73
    %vm75 = vcmask 326912
    %76 = vst.msk [vmem:[#allocation0] sm:$0x1] %vm75, %v74
    %s77 = scalar_lea.vmem %s0, 3
    %v78 = vld [vmem:[%s77] sm:$0x1]
    %79 = vrot.lane.b32.xlu0 %v78, 24
    %v80 = vpop.permute.xlu0 %79
    %vm81 = vcmask 261312
    %82 = vst.msk [vmem:[#allocation0] sm:$0x1] %vm81, %v80
    %s83 = scalar_lea.vmem %s0, 2
    %v84 = vld [vmem:[%s83] sm:$0x1]
    %85 = vrot.lane.b32.xlu0 %v84, 16
    %v86 = vpop.permute.xlu0 %85
    %vm87 = vcmask 195712
    %88 = vst.msk [vmem:[#allocation0] sm:$0x1] %vm87, %v86
    %s89 = scalar_lea.vmem %s0, 1
    %v90 = vld [vmem:[%s89] sm:$0x1]
    %91 = vrot.lane.b32.xlu0 %v90, 8
    %v92 = vpop.permute.xlu0 %91
    %vm93 = vcmask 130112
    %94 = vst.msk [vmem:[#allocation0] sm:$0x1] %vm93, %v92
    %s96 = sshllo.u32 0, 1
    %v98 = vld [vmem:[#allocation0] sm:%s96]
    %s99 = sshllo.u32 0, 1
    %100 = vst [vmem:[%s1] sm:%s99] %v98

// kernel: double_conv2d_forward.5
$region0: #{double_conv2d_forward.5}
  #allocation0 [shape = 'u32[]', space=smem, size = 0x4, offset = 0x4, fixed_abs, tag = 'smem constant byte address 0x4 - core index']
  #allocation1 [shape = 'u32[144,128]{1,0:T(1,128)}', space=vmem, size = 0x12000, scoped, tag = 'internal scratch']
  %s0 = inlined_call_operand.vmem [shape: f32[2,16,128], index: 0, kind: input, shape index: {}]
  %s1 = inlined_call_operand.vmem [shape: f32[1,128], index: 1, kind: input, shape index: {}]
  %s2 = inlined_call_operand.vmem [shape: f32[1,128], index: 2, kind: input, shape index: {}]
  %s3 = inlined_call_operand.vmem [shape: f32[2,16,128], index: 3, kind: output, shape index: {}]
  %s4 = sld [smem:[#allocation0]]
  $region45: #{double_conv2d_forward.5} parent=0
    _
  %s6 = ssub.s32 1, %s4
  %s7 = scalar_select 0, %s6, %s4
  loop: start=0, step=1, limit=4
  $region2: #{double_conv2d_forward.5} parent=0 // loop_pre_header
    _
  $region3: #{double_conv2d_forward.5} parent=0 // loop_header
    %s9 = sphi 0, %s13
    %p10 = scmp.ge.s32.totalorder %s9, 4
    %s19 = sphi 0, %s21
    %s22 = sphi 0, %s19
    %s23 = sphi 0, %s22
    %s39 = sphi 0, %s23
    %s43 = sphi 0, %s43
    %s45 = sphi 0, %s43
    %s46 = sphi 0, %s45
    %s60 = sphi 0, %s46
    %s64 = sphi 0, %s64
    %s66 = sphi 0, %s64
    %s67 = sphi 0, %s66
    %s81 = sphi 0, %s67
    %s87 = sphi 0, %s89
    %s90 = sphi 0, %s87
    %s91 = sphi 0, %s90
    %s107 = sphi 0, %s91
  $region4: #{double_conv2d_forward.5} parent=0 // loop_header_branch
    %12 = sbr.rel (%p10) target = $region8
  $region5: #{double_conv2d_forward.5} parent=0 // loop_body
    %s14 = ssub.s32 %s9, 1
    %s15 = ssub.s32 %s9, 2
    %s16 = sadd.s32 %s9, 1
    %s17 = ssub.s32 %s9, %s16
    %p18 = scmp.eq.s32.totalorder %s17, 0
    %s20 = sadd.s32 %s19, 1
    %s21 = scalar_select %p18, %s19, %s20
    %p24 = pneg %p18
    %p25 = scmp.eq.s32.totalorder %s9, 1
    %p26 = por %p24, %p25
    %p27 = scmp.ne.s32.totalorder %s19, %s22
    %p28 = scmp.eq.s32.totalorder %s9, 0
    %p29 = por %p27, %p28
    %p30 = scmp.ne.s32.totalorder %s19, %s22
    %p31 = scmp.eq.s32.totalorder %s14, 1
    %p32 = por %p30, %p31
    %p33 = scmp.ne.s32.totalorder %s22, %s23
    %p34 = scmp.eq.s32.totalorder %s14, 0
    %p35 = por %p33, %p34
    %p36 = scmp.ne.s32.totalorder %s22, %s23
    %p37 = scmp.eq.s32.totalorder %s15, 1
    %p38 = por %p36, %p37
    %p40 = scmp.ne.s32.totalorder %s23, %s39
    %p41 = scmp.eq.s32.totalorder %s15, 0
    %p42 = por %p40, %p41
    %s44 = sadd.s32 %s43, 1
    %p47 = scmp.eq.s32.totalorder %s9, 1
    %p48 = scmp.ne.s32.totalorder %s43, %s45
    %p49 = scmp.eq.s32.totalorder %s9, 0
    %p50 = por %p48, %p49
    %p51 = scmp.ne.s32.totalorder %s43, %s45
    %p52 = scmp.eq.s32.totalorder %s14, 1
    %p53 = por %p51, %p52
    %p54 = scmp.ne.s32.totalorder %s45, %s46
    %p55 = scmp.eq.s32.totalorder %s14, 0
    %p56 = por %p54, %p55
    %p57 = scmp.ne.s32.totalorder %s45, %s46
    %p58 = scmp.eq.s32.totalorder %s15, 1
    %p59 = por %p57, %p58
    %p61 = scmp.ne.s32.totalorder %s46, %s60
    %p62 = scmp.eq.s32.totalorder %s15, 0
    %p63 = por %p61, %p62
    %s65 = sadd.s32 %s64, 1
    %p68 = scmp.eq.s32.totalorder %s9, 1
    %p69 = scmp.ne.s32.totalorder %s64, %s66
    %p70 = scmp.eq.s32.totalorder %s9, 0
    %p71 = por %p69, %p70
    %p72 = scmp.ne.s32.totalorder %s64, %s66
    %p73 = scmp.eq.s32.totalorder %s14, 1
    %p74 = por %p72, %p73
    %p75 = scmp.ne.s32.totalorder %s66, %s67
    %p76 = scmp.eq.s32.totalorder %s14, 0
    %p77 = por %p75, %p76
    %p78 = scmp.ne.s32.totalorder %s66, %s67
    %p79 = scmp.eq.s32.totalorder %s15, 1
    %p80 = por %p78, %p79
    %p82 = scmp.ne.s32.totalorder %s67, %s81
    %p83 = scmp.eq.s32.totalorder %s15, 0
    %p84 = por %p82, %p83
    %s85 = ssub.s32 %s9, %s16
    %p86 = scmp.eq.s32.totalorder %s85, 0
    %s88 = sadd.s32 %s87, 1
    %s89 = scalar_select %p86, %s87, %s88
    %p92 = pneg %p86
    %p93 = scmp.eq.s32.totalorder %s9, 1
    %p94 = por %p92, %p93
    %p95 = scmp.ne.s32.totalorder %s87, %s90
    %p96 = scmp.eq.s32.totalorder %s9, 0
    %p97 = por %p95, %p96
    %p98 = scmp.ne.s32.totalorder %s87, %s90
    %p99 = scmp.eq.s32.totalorder %s14, 1
    %p100 = por %p98, %p99
    %p101 = scmp.ne.s32.totalorder %s90, %s91
    %p102 = scmp.eq.s32.totalorder %s14, 0
    %p103 = por %p101, %p102
    %p104 = scmp.ne.s32.totalorder %s90, %s91
    %p105 = scmp.eq.s32.totalorder %s15, 1
    %p106 = por %p104, %p105
    %p108 = scmp.ne.s32.totalorder %s91, %s107
    %p109 = scmp.eq.s32.totalorder %s15, 0
    %p110 = por %p108, %p109
    %p111 = scmp.le.s32.totalorder 1, %s9
    %p112 = scmp.lt.s32.totalorder %s9, 3
    %p113 = pnand %p111, %p112
    %p114 = pneg %p113
    // Predicated region
    $region9: #{double_conv2d_forward.5} parent=5 // pred_check
      _
    $region10: #{double_conv2d_forward.5} parent=5 // pred_check_branch
      %116 = sbr.rel (%p113) target = $region12
    $region11: #{double_conv2d_forward.5} parent=5 // pred_region
      %s117 = ssub.s32 %s9, 1
      // Predicated region
      $region13: #{double_conv2d_forward.5} parent=11 // pred_check
        %p118 = pneg %p56
      $region14: #{double_conv2d_forward.5} parent=11 // pred_check_branch
        %120 = sbr.rel (%p118) target = $region16
      $region15: #{double_conv2d_forward.5} parent=11 // pred_region
        _
      $region16: #{double_conv2d_forward.5} parent=11 // pred_fallthru
        _
      // Predicated region
      $region17: #{double_conv2d_forward.5} parent=11 // pred_check
        %p121 = pneg %p77
      $region18: #{double_conv2d_forward.5} parent=11 // pred_check_branch
        %123 = sbr.rel (%p121) target = $region20
      $region19: #{double_conv2d_forward.5} parent=11 // pred_region
        _
      $region20: #{double_conv2d_forward.5} parent=11 // pred_fallthru
        _
    $region12: #{double_conv2d_forward.5} parent=5 // pred_fallthru
      _
    %p124 = scmp.lt.s32.totalorder %s9, 2
    // Predicated region
    $region21: #{double_conv2d_forward.5} parent=5 // pred_check
      %p125 = pneg %p124
    $region22: #{double_conv2d_forward.5} parent=5 // pred_check_branch
      %127 = sbr.rel (%p125) target = $region24
    $region23: #{double_conv2d_forward.5} parent=5 // pred_region
      // Predicated region
      $region25: #{double_conv2d_forward.5} parent=23 // pred_check
        %p128 = pneg %p29
      $region26: #{double_conv2d_forward.5} parent=23 // pred_check_branch
        %130 = sbr.rel (%p128) target = $region28
      $region27: #{double_conv2d_forward.5} parent=23 // pred_region
        %p131 = scmp.lt.s32.totalorder %s9, 1
        %s132 = scalar_select %p131, %s9, 1
        %s133 = smul.addr %s132, 2
        %s134 = smul.addr %s133, 8
        %s135 = scalar_lea.vmem %s0, %s134
      $region28: #{double_conv2d_forward.5} parent=23 // pred_fallthru
        _
    $region24: #{double_conv2d_forward.5} parent=5 // pred_fallthru
      _
    %p136 = scmp.le.s32.totalorder 1, %s9
    %p137 = scmp.lt.s32.totalorder %s9, 3
    %p138 = pnand %p136, %p137
    %p139 = pneg %p138
    // Predicated region
    $region29: #{double_conv2d_forward.5} parent=5 // pred_check
      _
    $region30: #{double_conv2d_forward.5} parent=5 // pred_check_branch
      %141 = sbr.rel (%p138) target = $region32
    $region31: #{double_conv2d_forward.5} parent=5 // pred_region
      %s142 = ssub.s32 %s9, 1
      %p143 = scmp.lt.s32.totalorder %s14, 1
      %s144 = scalar_select %p143, %s14, 1
      %s145 = smul.addr %s144, 2
      %s146 = smul.addr %s145, 8
      %s147 = scalar_lea.vmem %s0, %s146
      %p148 = pneg %p35
      %p149 = pneg %p32
      %p150 = pneg %p56
      %p151 = pneg %p53
      %p152 = pneg %p77
      %p153 = pneg %p74
      %p154 = pneg %p103
      %p155 = pneg %p100
      %p156 = scmp.lt.s32.totalorder %s14, 1
      %s157 = scalar_select %p156, %s14, 1
      %s158 = smul.addr %s157, 2
      %s159 = smul.addr %s158, 8
      %s160 = scalar_lea.vmem %s3, %s159
      %p161 = scmp.lt.s32.totalorder %s14, 1
      %s162 = scalar_select %p161, %s14, 1
      %s163 = smul.addr %s162, 2
      %s164 = smul.addr %s163, 8
      %s165 = scalar_lea.vmem %s0, %s164
      %p166 = scmp.lt.s32.totalorder %s14, 1
      %s167 = scalar_select %p166, %s14, 1
      %s168 = smul.addr %s167, 2
      %s169 = smul.addr %s168, 8
      %s170 = scalar_lea.vmem %s3, %s169
      %v171 = vld [vmem:[%s165] sm:$0xff]
      %v172 = vld [vmem:[%s165 + $0x8] sm:$0xff]
      %v173 = vld [vmem:[%s1] sm:$0x1]
      %v175 = vlaneseq
      %v176 = vshrl.u32 %v175, 7
      %v177 = vsub.s32 0, %v176
      %v178 = vrot.slane %v173, %v177
      %v180 = vmul.f32 %v171, %v178
      %v181 = vmul.f32 %v172, %v178
      %v182 = vld [vmem:[%s2] sm:$0x1]
      %v184 = vlaneseq
      %v185 = vshrl.u32 %v184, 7
      %v186 = vsub.s32 0, %v185
      %v187 = vrot.slane %v182, %v186
      %v189 = vadd.f32 %v180, %v187
      %v190 = vadd.f32 %v181, %v187
      %v191 = vmax.f32 %v189, 0.0
      %v192 = vmax.f32 %v190, 0.0
      %193 = vst [vmem:[%s170] sm:$0xff] %v191
      %194 = vst [vmem:[%s170 + $0x8] sm:$0xff] %v192
      %p195 = scmp.lt.s32.totalorder %s14, 1
      %s196 = scalar_select %p195, %s14, 1
      %s197 = smul.addr %s196, 2
      %s198 = smul.addr %s197, 8
      %s199 = scalar_lea.vmem %s3, %s198
      // Predicated region
      $region33: #{double_conv2d_forward.5} parent=31 // pred_check
        %p200 = pneg %p100
      $region34: #{double_conv2d_forward.5} parent=31 // pred_check_branch
        %202 = sbr.rel (%p200) target = $region36
      $region35: #{double_conv2d_forward.5} parent=31 // pred_region
        _
      $region36: #{double_conv2d_forward.5} parent=31 // pred_fallthru
        _
    $region32: #{double_conv2d_forward.5} parent=5 // pred_fallthru
      _
    %p203 = scmp.le.s32.totalorder 2, %s9
    // Predicated region
    $region37: #{double_conv2d_forward.5} parent=5 // pred_check
      %p204 = pneg %p203
    $region38: #{double_conv2d_forward.5} parent=5 // pred_check_branch
      %206 = sbr.rel (%p204) target = $region40
    $region39: #{double_conv2d_forward.5} parent=5 // pred_region
      %s207 = ssub.s32 %s9, 2
      // Predicated region
      $region41: #{double_conv2d_forward.5} parent=39 // pred_check
        %p208 = pneg %p106
      $region42: #{double_conv2d_forward.5} parent=39 // pred_check_branch
        %210 = sbr.rel (%p208) target = $region44
      $region43: #{double_conv2d_forward.5} parent=39 // pred_region
        %p211 = scmp.lt.s32.totalorder %s15, 1
        %s212 = scalar_select %p211, %s15, 1
        %s213 = smul.addr %s212, 2
        %s214 = smul.addr %s213, 8
        %s215 = scalar_lea.vmem %s3, %s214
      $region44: #{double_conv2d_forward.5} parent=39 // pred_fallthru
        _
    $region40: #{double_conv2d_forward.5} parent=5 // pred_fallthru
      _
  $region6: #{double_conv2d_forward.5} parent=0 // loop_footer
    %s13 = sadd.s32 1, %s9
  $region7: #{double_conv2d_forward.5} parent=0 // loop_footer_branch
    %8 = sbr.rel target = $region3
  $region8: #{double_conv2d_forward.5} parent=0 // loop_exit
    _

// kernel: double_conv2d_forward.4
$region0: #{double_conv2d_forward.4}
  #allocation0 [shape = 'u32[]', space=smem, size = 0x4, offset = 0x4, fixed_abs, tag = 'smem constant byte address 0x4 - core index']
  #allocation1 [shape = 'u32[144,128]{1,0:T(1,128)}', space=vmem, size = 0x12000, scoped, tag = 'internal scratch']
  %s0 = inlined_call_operand.vmem [shape: f32[2,16,128], index: 0, kind: input, shape index: {}]
  %s1 = inlined_call_operand.vmem [shape: f32[3,128,128], index: 1, kind: input, shape index: {}]
  %s2 = inlined_call_operand.vmem [shape: f32[1,128], index: 2, kind: input, shape index: {}]
  %s3 = inlined_call_operand.vmem [shape: f32[1,128], index: 3, kind: input, shape index: {}]
  %s4 = inlined_call_operand.vmem [shape: f32[128,8], index: 4, kind: input, shape index: {}]
  %s5 = inlined_call_operand.vmem [shape: f32[2,16,128], index: 5, kind: output, shape index: {0}]
  %s6 = inlined_call_operand.vmem [shape: f32[2,2,8], index: 6, kind: output, shape index: {1}]
  %7 = xla_tuple %s5, %s6
  %s8 = sld [smem:[#allocation0]]
  $region61: #{double_conv2d_forward.4} parent=0
    _
  %s10 = ssub.s32 1, %s8
  %s11 = scalar_select 0, %s10, %s8
  loop: start=0, step=1, limit=4
  $region2: #{double_conv2d_forward.4} parent=0 // loop_pre_header
    _
  $region3: #{double_conv2d_forward.4} parent=0 // loop_header
    %s13 = sphi 0, %s17
    %p14 = scmp.ge.s32.totalorder %s13, 4
    %s23 = sphi 0, %s25
    %s26 = sphi 0, %s23
    %s27 = sphi 0, %s26
    %s43 = sphi 0, %s27
    %s47 = sphi 0, %s47
    %s49 = sphi 0, %s47
    %s50 = sphi 0, %s49
    %s64 = sphi 0, %s50
    %s68 = sphi 0, %s68
    %s70 = sphi 0, %s68
    %s71 = sphi 0, %s70
    %s85 = sphi 0, %s71
    %s89 = sphi 0, %s89
    %s91 = sphi 0, %s89
    %s92 = sphi 0, %s91
    %s106 = sphi 0, %s92
    %s110 = sphi 0, %s110
    %s112 = sphi 0, %s110
    %s113 = sphi 0, %s112
    %s127 = sphi 0, %s113
    %s133 = sphi 0, %s135
    %s136 = sphi 0, %s133
    %s137 = sphi 0, %s136
    %s153 = sphi 0, %s137
    %s159 = sphi 0, %s161
    %s162 = sphi 0, %s159
    %s163 = sphi 0, %s162
    %s179 = sphi 0, %s163
  $region4: #{double_conv2d_forward.4} parent=0 // loop_header_branch
    %16 = sbr.rel (%p14) target = $region8
  $region5: #{double_conv2d_forward.4} parent=0 // loop_body
    %s18 = ssub.s32 %s13, 1
    %s19 = ssub.s32 %s13, 2
    %s20 = sadd.s32 %s13, 1
    %s21 = ssub.s32 %s13, %s20
    %p22 = scmp.eq.s32.totalorder %s21, 0
    %s24 = sadd.s32 %s23, 1
    %s25 = scalar_select %p22, %s23, %s24
    %p28 = pneg %p22
    %p29 = scmp.eq.s32.totalorder %s13, 1
    %p30 = por %p28, %p29
    %p31 = scmp.ne.s32.totalorder %s23, %s26
    %p32 = scmp.eq.s32.totalorder %s13, 0
    %p33 = por %p31, %p32
    %p34 = scmp.ne.s32.totalorder %s23, %s26
    %p35 = scmp.eq.s32.totalorder %s18, 1
    %p36 = por %p34, %p35
    %p37 = scmp.ne.s32.totalorder %s26, %s27
    %p38 = scmp.eq.s32.totalorder %s18, 0
    %p39 = por %p37, %p38
    %p40 = scmp.ne.s32.totalorder %s26, %s27
    %p41 = scmp.eq.s32.totalorder %s19, 1
    %p42 = por %p40, %p41
    %p44 = scmp.ne.s32.totalorder %s27, %s43
    %p45 = scmp.eq.s32.totalorder %s19, 0
    %p46 = por %p44, %p45
    %s48 = sadd.s32 %s47, 1
    %p51 = scmp.eq.s32.totalorder %s13, 1
    %p52 = scmp.ne.s32.totalorder %s47, %s49
    %p53 = scmp.eq.s32.totalorder %s13, 0
    %p54 = por %p52, %p53
    %p55 = scmp.ne.s32.totalorder %s47, %s49
    %p56 = scmp.eq.s32.totalorder %s18, 1
    %p57 = por %p55, %p56
    %p58 = scmp.ne.s32.totalorder %s49, %s50
    %p59 = scmp.eq.s32.totalorder %s18, 0
    %p60 = por %p58, %p59
    %p61 = scmp.ne.s32.totalorder %s49, %s50
    %p62 = scmp.eq.s32.totalorder %s19, 1
    %p63 = por %p61, %p62
    %p65 = scmp.ne.s32.totalorder %s50, %s64
    %p66 = scmp.eq.s32.totalorder %s19, 0
    %p67 = por %p65, %p66
    %s69 = sadd.s32 %s68, 1
    %p72 = scmp.eq.s32.totalorder %s13, 1
    %p73 = scmp.ne.s32.totalorder %s68, %s70
    %p74 = scmp.eq.s32.totalorder %s13, 0
    %p75 = por %p73, %p74
    %p76 = scmp.ne.s32.totalorder %s68, %s70
    %p77 = scmp.eq.s32.totalorder %s18, 1
    %p78 = por %p76, %p77
    %p79 = scmp.ne.s32.totalorder %s70, %s71
    %p80 = scmp.eq.s32.totalorder %s18, 0
    %p81 = por %p79, %p80
    %p82 = scmp.ne.s32.totalorder %s70, %s71
    %p83 = scmp.eq.s32.totalorder %s19, 1
    %p84 = por %p82, %p83
    %p86 = scmp.ne.s32.totalorder %s71, %s85
    %p87 = scmp.eq.s32.totalorder %s19, 0
    %p88 = por %p86, %p87
    %s90 = sadd.s32 %s89, 1
    %p93 = scmp.eq.s32.totalorder %s13, 1
    %p94 = scmp.ne.s32.totalorder %s89, %s91
    %p95 = scmp.eq.s32.totalorder %s13, 0
    %p96 = por %p94, %p95
    %p97 = scmp.ne.s32.totalorder %s89, %s91
    %p98 = scmp.eq.s32.totalorder %s18, 1
    %p99 = por %p97, %p98
    %p100 = scmp.ne.s32.totalorder %s91, %s92
    %p101 = scmp.eq.s32.totalorder %s18, 0
    %p102 = por %p100, %p101
    %p103 = scmp.ne.s32.totalorder %s91, %s92
    %p104 = scmp.eq.s32.totalorder %s19, 1
    %p105 = por %p103, %p104
    %p107 = scmp.ne.s32.totalorder %s92, %s106
    %p108 = scmp.eq.s32.totalorder %s19, 0
    %p109 = por %p107, %p108
    %s111 = sadd.s32 %s110, 1
    %p114 = scmp.eq.s32.totalorder %s13, 1
    %p115 = scmp.ne.s32.totalorder %s110, %s112
    %p116 = scmp.eq.s32.totalorder %s13, 0
    %p117 = por %p115, %p116
    %p118 = scmp.ne.s32.totalorder %s110, %s112
    %p119 = scmp.eq.s32.totalorder %s18, 1
    %p120 = por %p118, %p119
    %p121 = scmp.ne.s32.totalorder %s112, %s113
    %p122 = scmp.eq.s32.totalorder %s18, 0
    %p123 = por %p121, %p122
    %p124 = scmp.ne.s32.totalorder %s112, %s113
    %p125 = scmp.eq.s32.totalorder %s19, 1
    %p126 = por %p124, %p125
    %p128 = scmp.ne.s32.totalorder %s113, %s127
    %p129 = scmp.eq.s32.totalorder %s19, 0
    %p130 = por %p128, %p129
    %s131 = ssub.s32 %s13, %s20
    %p132 = scmp.eq.s32.totalorder %s131, 0
    %s134 = sadd.s32 %s133, 1
    %s135 = scalar_select %p132, %s133, %s134
    %p138 = pneg %p132
    %p139 = scmp.eq.s32.totalorder %s13, 1
    %p140 = por %p138, %p139
    %p141 = scmp.ne.s32.totalorder %s133, %s136
    %p142 = scmp.eq.s32.totalorder %s13, 0
    %p143 = por %p141, %p142
    %p144 = scmp.ne.s32.totalorder %s133, %s136
    %p145 = scmp.eq.s32.totalorder %s18, 1
    %p146 = por %p144, %p145
    %p147 = scmp.ne.s32.totalorder %s136, %s137
    %p148 = scmp.eq.s32.totalorder %s18, 0
    %p149 = por %p147, %p148
    %p150 = scmp.ne.s32.totalorder %s136, %s137
    %p151 = scmp.eq.s32.totalorder %s19, 1
    %p152 = por %p150, %p151
    %p154 = scmp.ne.s32.totalorder %s137, %s153
    %p155 = scmp.eq.s32.totalorder %s19, 0
    %p156 = por %p154, %p155
    %s157 = ssub.s32 %s13, %s20
    %p158 = scmp.eq.s32.totalorder %s157, 0
    %s160 = sadd.s32 %s159, 1
    %s161 = scalar_select %p158, %s159, %s160
    %p164 = pneg %p158
    %p165 = scmp.eq.s32.totalorder %s13, 1
    %p166 = por %p164, %p165
    %p167 = scmp.ne.s32.totalorder %s159, %s162
    %p168 = scmp.eq.s32.totalorder %s13, 0
    %p169 = por %p167, %p168
    %p170 = scmp.ne.s32.totalorder %s159, %s162
    %p171 = scmp.eq.s32.totalorder %s18, 1
    %p172 = por %p170, %p171
    %p173 = scmp.ne.s32.totalorder %s162, %s163
    %p174 = scmp.eq.s32.totalorder %s18, 0
    %p175 = por %p173, %p174
    %p176 = scmp.ne.s32.totalorder %s162, %s163
    %p177 = scmp.eq.s32.totalorder %s19, 1
    %p178 = por %p176, %p177
    %p180 = scmp.ne.s32.totalorder %s163, %s179
    %p181 = scmp.eq.s32.totalorder %s19, 0
    %p182 = por %p180, %p181
    %p183 = scmp.le.s32.totalorder 1, %s13
    %p184 = scmp.lt.s32.totalorder %s13, 3
    %p185 = pnand %p183, %p184
    %p186 = pneg %p185
    // Predicated region
    $region9: #{double_conv2d_forward.4} parent=5 // pred_check
      _
    $region10: #{double_conv2d_forward.4} parent=5 // pred_check_branch
      %188 = sbr.rel (%p185) target = $region12
    $region11: #{double_conv2d_forward.4} parent=5 // pred_region
      %s189 = ssub.s32 %s13, 1
      // Predicated region
      $region13: #{double_conv2d_forward.4} parent=11 // pred_check
        %p190 = pneg %p60
      $region14: #{double_conv2d_forward.4} parent=11 // pred_check_branch
        %192 = sbr.rel (%p190) target = $region16
      $region15: #{double_conv2d_forward.4} parent=11 // pred_region
        _
      $region16: #{double_conv2d_forward.4} parent=11 // pred_fallthru
        _
      // Predicated region
      $region17: #{double_conv2d_forward.4} parent=11 // pred_check
        %p193 = pneg %p81
      $region18: #{double_conv2d_forward.4} parent=11 // pred_check_branch
        %195 = sbr.rel (%p193) target = $region20
      $region19: #{double_conv2d_forward.4} parent=11 // pred_region
        _
      $region20: #{double_conv2d_forward.4} parent=11 // pred_fallthru
        _
      // Predicated region
      $region21: #{double_conv2d_forward.4} parent=11 // pred_check
        %p196 = pneg %p102
      $region22: #{double_conv2d_forward.4} parent=11 // pred_check_branch
        %198 = sbr.rel (%p196) target = $region24
      $region23: #{double_conv2d_forward.4} parent=11 // pred_region
        _
      $region24: #{double_conv2d_forward.4} parent=11 // pred_fallthru
        _
      // Predicated region
      $region25: #{double_conv2d_forward.4} parent=11 // pred_check
        %p199 = pneg %p123
      $region26: #{double_conv2d_forward.4} parent=11 // pred_check_branch
        %201 = sbr.rel (%p199) target = $region28
      $region27: #{double_conv2d_forward.4} parent=11 // pred_region
        _
      $region28: #{double_conv2d_forward.4} parent=11 // pred_fallthru
        _
    $region12: #{double_conv2d_forward.4} parent=5 // pred_fallthru
      _
    %p202 = scmp.lt.s32.totalorder %s13, 2
    // Predicated region
    $region29: #{double_conv2d_forward.4} parent=5 // pred_check
      %p203 = pneg %p202
    $region30: #{double_conv2d_forward.4} parent=5 // pred_check_branch
      %205 = sbr.rel (%p203) target = $region32
    $region31: #{double_conv2d_forward.4} parent=5 // pred_region
      // Predicated region
      $region33: #{double_conv2d_forward.4} parent=31 // pred_check
        %p206 = pneg %p33
      $region34: #{double_conv2d_forward.4} parent=31 // pred_check_branch
        %208 = sbr.rel (%p206) target = $region36
      $region35: #{double_conv2d_forward.4} parent=31 // pred_region
        %p209 = scmp.lt.s32.totalorder %s13, 1
        %s210 = scalar_select %p209, %s13, 1
        %s211 = smul.addr %s210, 2
        %s212 = smul.addr %s211, 8
        %s213 = scalar_lea.vmem %s0, %s212
      $region36: #{double_conv2d_forward.4} parent=31 // pred_fallthru
        _
    $region32: #{double_conv2d_forward.4} parent=5 // pred_fallthru
      _
    %p214 = scmp.le.s32.totalorder 1, %s13
    %p215 = scmp.lt.s32.totalorder %s13, 3
    %p216 = pnand %p214, %p215
    %p217 = pneg %p216
    // Predicated region
    $region37: #{double_conv2d_forward.4} parent=5 // pred_check
      _
    $region38: #{double_conv2d_forward.4} parent=5 // pred_check_branch
      %219 = sbr.rel (%p216) target = $region40
    $region39: #{double_conv2d_forward.4} parent=5 // pred_region
      %s220 = ssub.s32 %s13, 1
      %p221 = scmp.lt.s32.totalorder %s18, 1
      %s222 = scalar_select %p221, %s18, 1
      %s223 = smul.addr %s222, 2
      %s224 = smul.addr %s223, 8
      %s225 = scalar_lea.vmem %s0, %s224
      %p226 = pneg %p39
      %p227 = pneg %p36
      %p228 = pneg %p60
      %p229 = pneg %p57
      %p230 = pneg %p81
      %p231 = pneg %p78
      %p232 = pneg %p102
      %p233 = pneg %p99
      %p234 = pneg %p123
      %p235 = pneg %p120
      %p236 = pneg %p149
      %p237 = pneg %p146
      %p238 = scmp.lt.s32.totalorder %s18, 1
      %s239 = scalar_select %p238, %s18, 1
      %s240 = smul.addr %s239, 2
      %s241 = smul.addr %s240, 8
      %s242 = scalar_lea.vmem %s5, %s241
      %p243 = pneg %p175
      %p244 = pneg %p172
      %p245 = scmp.lt.s32.totalorder %s18, 1
      %s246 = scalar_select %p245, %s18, 1
      %s247 = smul.addr %s246, 2
      %s248 = scalar_lea.vmem %s6, %s247
      %p249 = scmp.lt.s32.totalorder %s18, 1
      %s250 = scalar_select %p249, %s18, 1
      %s251 = smul.addr %s250, 2
      %s252 = smul.addr %s251, 8
      %s253 = scalar_lea.vmem %s0, %s252
      %p254 = scmp.lt.s32.totalorder %s18, 1
      %s255 = scalar_select %p254, %s18, 1
      %s256 = smul.addr %s255, 2
      %s257 = smul.addr %s256, 8
      %s258 = scalar_lea.vmem %s5, %s257
      %p259 = scmp.lt.s32.totalorder %s18, 1
      %s260 = scalar_select %p259, %s18, 1
      %s261 = smul.addr %s260, 2
      %s262 = scalar_lea.vmem %s6, %s261
      %v263 = vld [vmem:[%s253] sm:$0xff]
      %v264 = vld [vmem:[%s253 + $0x8] sm:$0xff]
      %v265 = vld [vmem:[%s2] sm:$0x1]
      %v267 = vlaneseq
      %v268 = vshrl.u32 %v267, 7
      %v269 = vsub.s32 0, %v268
      %v270 = vrot.slane %v265, %v269
      %v272 = vmul.f32 %v263, %v270
      %v273 = vmul.f32 %v264, %v270
      %v274 = vld [vmem:[%s3] sm:$0x1]
      %v276 = vlaneseq
      %v277 = vshrl.u32 %v276, 7
      %v278 = vsub.s32 0, %v277
      %v279 = vrot.slane %v274, %v278
      %v281 = vadd.f32 %v272, %v279
      %v282 = vadd.f32 %v273, %v279
      %v283 = vmax.f32 %v281, 0.0
      %v284 = vmax.f32 %v282, 0.0
      %vm287 = vcmask 1040384
      %v288 = vrot.slane %v283, 7
      %v289 = vrot.slane %v284, 7
      %v290 = vsel %vm287, %v288, %v289
      %v293 = vsel %vm287, 0.0, %v288
      %vm294 = vcmask 1046528
      %v295 = vrot.slane %v283, 1
      %v296 = vrot.slane %v284, 1
      %v297 = vsel %vm294, %v295, %v296
      %v300 = vsel %vm294, %v296, 0.0
      %v301 = vld [vmem:[%s1] sm:$0xff]
      %v302 = vld [vmem:[%s1 + $0x8] sm:$0xff]
      %v303 = vld [vmem:[%s1 + $0x10] sm:$0xff]
      %v304 = vld [vmem:[%s1 + $0x18] sm:$0xff]
      %v305 = vld [vmem:[%s1 + $0x20] sm:$0xff]
      %v306 = vld [vmem:[%s1 + $0x28] sm:$0xff]
      %v307 = vld [vmem:[%s1 + $0x30] sm:$0xff]
      %v308 = vld [vmem:[%s1 + $0x38] sm:$0xff]
      %v309 = vld [vmem:[%s1 + $0x40] sm:$0xff]
      %v310 = vld [vmem:[%s1 + $0x48] sm:$0xff]
      %v311 = vld [vmem:[%s1 + $0x50] sm:$0xff]
      %v312 = vld [vmem:[%s1 + $0x58] sm:$0xff]
      %v313 = vld [vmem:[%s1 + $0x60] sm:$0xff]
      %v314 = vld [vmem:[%s1 + $0x68] sm:$0xff]
      %v315 = vld [vmem:[%s1 + $0x70] sm:$0xff]
      %v316 = vld [vmem:[%s1 + $0x78] sm:$0xff]
      %s317 = scalar_lea.vmem %s1, 128
      %v318 = vld [vmem:[%s317] sm:$0xff]
      %v319 = vld [vmem:[%s317 + $0x8] sm:$0xff]
      %v320 = vld [vmem:[%s317 + $0x10] sm:$0xff]
      %v321 = vld [vmem:[%s317 + $0x18] sm:$0xff]
      %v322 = vld [vmem:[%s317 + $0x20] sm:$0xff]
      %v323 = vld [vmem:[%s317 + $0x28] sm:$0xff]
      %v324 = vld [vmem:[%s317 + $0x30] sm:$0xff]
      %v325 = vld [vmem:[%s317 + $0x38] sm:$0xff]
      %v326 = vld [vmem:[%s317 + $0x40] sm:$0xff]
      %v327 = vld [vmem:[%s317 + $0x48] sm:$0xff]
      %v328 = vld [vmem:[%s317 + $0x50] sm:$0xff]
      %v329 = vld [vmem:[%s317 + $0x58] sm:$0xff]
      %v330 = vld [vmem:[%s317 + $0x60] sm:$0xff]
      %v331 = vld [vmem:[%s317 + $0x68] sm:$0xff]
      %v332 = vld [vmem:[%s317 + $0x70] sm:$0xff]
      %v333 = vld [vmem:[%s317 + $0x78] sm:$0xff]
      %334 = vmatprep.subr.mxu0 0.0
      %335 = vmatpush1.msra.mxu0 %v318
      %336 = vmatprep.subr.mxu0 0.0
      %337 = vmatpush1.msra.mxu0 %v319
      %338 = vmatprep.subr.mxu0 0.0
      %339 = vmatpush1.msra.mxu0 %v320
      %340 = vmatprep.subr.mxu0 0.0
      %341 = vmatpush1.msra.mxu0 %v321
      %342 = vmatprep.subr.mxu0 0.0
      %343 = vmatpush1.msra.mxu0 %v322
      %344 = vmatprep.subr.mxu0 0.0
      %345 = vmatpush1.msra.mxu0 %v323
      %346 = vmatprep.subr.mxu0 0.0
      %347 = vmatpush1.msra.mxu0 %v324
      %348 = vmatprep.subr.mxu0 0.0
      %349 = vmatpush1.msra.mxu0 %v325
      %350 = vmatprep.subr.mxu0 0.0
      %351 = vmatpush1.msra.mxu0 %v326
      %352 = vmatprep.subr.mxu0 0.0
      %353 = vmatpush1.msra.mxu0 %v327
      %354 = vmatprep.subr.mxu0 0.0
      %355 = vmatpush1.msra.mxu0 %v328
      %356 = vmatprep.subr.mxu0 0.0
      %357 = vmatpush1.msra.mxu0 %v329
      %358 = vmatprep.subr.mxu0 0.0
      %359 = vmatpush1.msra.mxu0 %v330
      %360 = vmatprep.subr.mxu0 0.0
      %361 = vmatpush1.msra.mxu0 %v331
      %362 = vmatprep.subr.mxu0 0.0
      %363 = vmatpush1.msra.mxu0 %v332
      %364 = vmatprep.subr.mxu0 0.0
      %365 = vmatpush1.msra.mxu0 %v333
      %366 = vmatprep.subr.mxu0 0.0
      %367 = vmatpush1.msra.mxu0 0.0
      %368 = vmatprep.subr.mxu0 0.0
      %369 = vmatpush1.msra.mxu0 0.0
      %370 = vmatprep.subr.mxu0 0.0
      %371 = vmatpush1.msra.mxu0 0.0
      %372 = vmatprep.subr.mxu0 0.0
      %373 = vmatpush1.msra.mxu0 0.0
      %374 = vmatprep.subr.mxu0 0.0
      %375 = vmatpush1.msra.mxu0 0.0
      %376 = vmatprep.subr.mxu0 0.0
      %377 = vmatpush1.msra.mxu0 0.0
      %378 = vmatprep.subr.mxu0 0.0
      %379 = vmatpush1.msra.mxu0 0.0
      %380 = vmatprep.subr.mxu0 0.0
      %381 = vmatpush1.msra.mxu0 0.0
      %382 = vmatprep.subr.mxu0 0.0
      %383 = vmatpush1.msra.mxu0 0.0
      %384 = vmatprep.subr.mxu0 0.0
      %385 = vmatpush1.msra.mxu0 0.0
      %386 = vmatprep.subr.mxu0 0.0
      %387 = vmatpush1.msra.mxu0 0.0
      %388 = vmatprep.subr.mxu0 0.0
      %389 = vmatpush1.msra.mxu0 0.0
      %390 = vmatprep.subr.mxu0 0.0
      %391 = vmatpush1.msra.mxu0 0.0
      %392 = vmatprep.subr.mxu0 0.0
      %393 = vmatpush1.msra.mxu0 0.0
      %394 = vmatprep.subr.mxu0 0.0
      %395 = vmatpush1.msra.mxu0 0.0
      %396 = vmatprep.subr.mxu0 0.0
      %397 = vmatpush1.msra.mxu0 0.0
      %398 = vmatprep.mubr.f32.mxu0 0.0
      %399 = vmatmul.mubr.f32.gmra.mrb[0].mxu0 %v283
      %v400 = vpop.f32.mrb[0].mxu0
      %v401 = vadd.f32 0.0, %v400
      %v402 = vpop.f32.mrb[0].mxu0
      %403 = vmatprep.mubr.f32.mxu0 0.0
      %404 = vmatmul.mubr.f32.gmra.mrb[0].mxu0 %v284
      %v405 = vpop.f32.mrb[0].mxu0
      %v406 = vadd.f32 0.0, %v405
      %v407 = vpop.f32.mrb[0].mxu0
      %408 = vdwg.mxu0
      %409 = vmatprep.subr.mxu0 0.0
      %410 = vmatpush1.msra.mxu0 %v301
      %411 = vmatprep.subr.mxu0 0.0
      %412 = vmatpush1.msra.mxu0 %v302
      %413 = vmatprep.subr.mxu0 0.0
      %414 = vmatpush1.msra.mxu0 %v303
      %415 = vmatprep.subr.mxu0 0.0
      %416 = vmatpush1.msra.mxu0 %v304
      %417 = vmatprep.subr.mxu0 0.0
      %418 = vmatpush1.msra.mxu0 %v305
      %419 = vmatprep.subr.mxu0 0.0
      %420 = vmatpush1.msra.mxu0 %v306
      %421 = vmatprep.subr.mxu0 0.0
      %422 = vmatpush1.msra.mxu0 %v307
      %423 = vmatprep.subr.mxu0 0.0
      %424 = vmatpush1.msra.mxu0 %v308
      %425 = vmatprep.subr.mxu0 0.0
      %426 = vmatpush1.msra.mxu0 %v309
      %427 = vmatprep.subr.mxu0 0.0
      %428 = vmatpush1.msra.mxu0 %v310
      %429 = vmatprep.subr.mxu0 0.0
      %430 = vmatpush1.msra.mxu0 %v311
      %431 = vmatprep.subr.mxu0 0.0
      %432 = vmatpush1.msra.mxu0 %v312
      %433 = vmatprep.subr.mxu0 0.0
      %434 = vmatpush1.msra.mxu0 %v313
      %435 = vmatprep.subr.mxu0 0.0
      %436 = vmatpush1.msra.mxu0 %v314
      %437 = vmatprep.subr.mxu0 0.0
      %438 = vmatpush1.msra.mxu0 %v315
      %439 = vmatprep.subr.mxu0 0.0
      %440 = vmatpush1.msra.mxu0 %v316
      %441 = vmatprep.subr.mxu0 0.0
      %442 = vmatpush1.msra.mxu0 0.0
      %443 = vmatprep.subr.mxu0 0.0
      %444 = vmatpush1.msra.mxu0 0.0
      %445 = vmatprep.subr.mxu0 0.0
      %446 = vmatpush1.msra.mxu0 0.0
      %447 = vmatprep.subr.mxu0 0.0
      %448 = vmatpush1.msra.mxu0 0.0
      %449 = vmatprep.subr.mxu0 0.0
      %450 = vmatpush1.msra.mxu0 0.0
      %451 = vmatprep.subr.mxu0 0.0
      %452 = vmatpush1.msra.mxu0 0.0
      %453 = vmatprep.subr.mxu0 0.0
      %454 = vmatpush1.msra.mxu0 0.0
      %455 = vmatprep.subr.mxu0 0.0
      %456 = vmatpush1.msra.mxu0 0.0
      %457 = vmatprep.subr.mxu0 0.0
      %458 = vmatpush1.msra.mxu0 0.0
      %459 = vmatprep.subr.mxu0 0.0
      %460 = vmatpush1.msra.mxu0 0.0
      %461 = vmatprep.subr.mxu0 0.0
      %462 = vmatpush1.msra.mxu0 0.0
      %463 = vmatprep.subr.mxu0 0.0
      %464 = vmatpush1.msra.mxu0 0.0
      %465 = vmatprep.subr.mxu0 0.0
      %466 = vmatpush1.msra.mxu0 0.0
      %467 = vmatprep.subr.mxu0 0.0
      %468 = vmatpush1.msra.mxu0 0.0
      %469 = vmatprep.subr.mxu0 0.0
      %470 = vmatpush1.msra.mxu0 0.0
      %471 = vmatprep.subr.mxu0 0.0
      %472 = vmatpush1.msra.mxu0 0.0
      %473 = vmatprep.mubr.f32.mxu0 0.0
      %474 = vmatmul.mubr.f32.gmra.mrb[0].mxu0 %v293
      %v475 = vpop.f32.mrb[0].mxu0
      %v476 = vadd.f32 %v401, %v475
      %v477 = vpop.f32.mrb[0].mxu0
      %478 = vmatprep.mubr.f32.mxu0 0.0
      %479 = vmatmul.mubr.f32.gmra.mrb[0].mxu0 %v290
      %v480 = vpop.f32.mrb[0].mxu0
      %v481 = vadd.f32 %v406, %v480
      %v482 = vpop.f32.mrb[0].mxu0
      %483 = vdwg.mxu0
      %s484 = scalar_lea.vmem %s1, 256
      %v485 = vld [vmem:[%s484] sm:$0xff]
      %v486 = vld [vmem:[%s484 + $0x8] sm:$0xff]
      %v487 = vld [vmem:[%s484 + $0x10] sm:$0xff]
      %v488 = vld [vmem:[%s484 + $0x18] sm:$0xff]
      %v489 = vld [vmem:[%s484 + $0x20] sm:$0xff]
      %v490 = vld [vmem:[%s484 + $0x28] sm:$0xff]
      %v491 = vld [vmem:[%s484 + $0x30] sm:$0xff]
      %v492 = vld [vmem:[%s484 + $0x38] sm:$0xff]
      %v493 = vld [vmem:[%s484 + $0x40] sm:$0xff]
      %v494 = vld [vmem:[%s484 + $0x48] sm:$0xff]
      %v495 = vld [vmem:[%s484 + $0x50] sm:$0xff]
      %v496 = vld [vmem:[%s484 + $0x58] sm:$0xff]
      %v497 = vld [vmem:[%s484 + $0x60] sm:$0xff]
      %v498 = vld [vmem:[%s484 + $0x68] sm:$0xff]
      %v499 = vld [vmem:[%s484 + $0x70] sm:$0xff]
      %v500 = vld [vmem:[%s484 + $0x78] sm:$0xff]
      %501 = vmatprep.subr.mxu0 0.0
      %502 = vmatpush1.msra.mxu0 %v485
      %503 = vmatprep.subr.mxu0 0.0
      %504 = vmatpush1.msra.mxu0 %v486
      %505 = vmatprep.subr.mxu0 0.0
      %506 = vmatpush1.msra.mxu0 %v487
      %507 = vmatprep.subr.mxu0 0.0
      %508 = vmatpush1.msra.mxu0 %v488
      %509 = vmatprep.subr.mxu0 0.0
      %510 = vmatpush1.msra.mxu0 %v489
      %511 = vmatprep.subr.mxu0 0.0
      %512 = vmatpush1.msra.mxu0 %v490
      %513 = vmatprep.subr.mxu0 0.0
      %514 = vmatpush1.msra.mxu0 %v491
      %515 = vmatprep.subr.mxu0 0.0
      %516 = vmatpush1.msra.mxu0 %v492
      %517 = vmatprep.subr.mxu0 0.0
      %518 = vmatpush1.msra.mxu0 %v493
      %519 = vmatprep.subr.mxu0 0.0
      %520 = vmatpush1.msra.mxu0 %v494
      %521 = vmatprep.subr.mxu0 0.0
      %522 = vmatpush1.msra.mxu0 %v495
      %523 = vmatprep.subr.mxu0 0.0
      %524 = vmatpush1.msra.mxu0 %v496
      %525 = vmatprep.subr.mxu0 0.0
      %526 = vmatpush1.msra.mxu0 %v497
      %527 = vmatprep.subr.mxu0 0.0
      %528 = vmatpush1.msra.mxu0 %v498
      %529 = vmatprep.subr.mxu0 0.0
      %530 = vmatpush1.msra.mxu0 %v499
      %531 = vmatprep.subr.mxu0 0.0
      %532 = vmatpush1.msra.mxu0 %v500
      %533 = vmatprep.subr.mxu0 0.0
      %534 = vmatpush1.msra.mxu0 0.0
      %535 = vmatprep.subr.mxu0 0.0
      %536 = vmatpush1.msra.mxu0 0.0
      %537 = vmatprep.subr.mxu0 0.0
      %538 = vmatpush1.msra.mxu0 0.0
      %539 = vmatprep.subr.mxu0 0.0
      %540 = vmatpush1.msra.mxu0 0.0
      %541 = vmatprep.subr.mxu0 0.0
      %542 = vmatpush1.msra.mxu0 0.0
      %543 = vmatprep.subr.mxu0 0.0
      %544 = vmatpush1.msra.mxu0 0.0
      %545 = vmatprep.subr.mxu0 0.0
      %546 = vmatpush1.msra.mxu0 0.0
      %547 = vmatprep.subr.mxu0 0.0
      %548 = vmatpush1.msra.mxu0 0.0
      %549 = vmatprep.subr.mxu0 0.0
      %550 = vmatpush1.msra.mxu0 0.0
      %551 = vmatprep.subr.mxu0 0.0
      %552 = vmatpush1.msra.mxu0 0.0
      %553 = vmatprep.subr.mxu0 0.0
      %554 = vmatpush1.msra.mxu0 0.0
      %555 = vmatprep.subr.mxu0 0.0
      %556 = vmatpush1.msra.mxu0 0.0
      %557 = vmatprep.subr.mxu0 0.0
      %558 = vmatpush1.msra.mxu0 0.0
      %559 = vmatprep.subr.mxu0 0.0
      %560 = vmatpush1.msra.mxu0 0.0
      %561 = vmatprep.subr.mxu0 0.0
      %562 = vmatpush1.msra.mxu0 0.0
      %563 = vmatprep.subr.mxu0 0.0
      %564 = vmatpush1.msra.mxu0 0.0
      %565 = vmatprep.mubr.f32.mxu0 0.0
      %566 = vmatmul.mubr.f32.gmra.mrb[0].mxu0 %v297
      %v567 = vpop.f32.mrb[0].mxu0
      %v568 = vadd.f32 0.0, %v567
      %v569 = vpop.f32.mrb[0].mxu0
      %570 = vmatprep.mubr.f32.mxu0 0.0
      %571 = vmatmul.mubr.f32.gmra.mrb[0].mxu0 %v300
      %v572 = vpop.f32.mrb[0].mxu0
      %v573 = vadd.f32 0.0, %v572
      %v574 = vpop.f32.mrb[0].mxu0
      %575 = vdwg.mxu0
      %v576 = vadd.f32 %v476, %v568
      %v577 = vadd.f32 %v481, %v573
      %578 = vst [vmem:[%s258] sm:$0xff] %v576
      %579 = vst [vmem:[%s258 + $0x8] sm:$0xff] %v577
      %v580 = vld [vmem:[%s4] sm:$0xff]
      %v581 = vld [vmem:[%s4 + $0x8] sm:$0xff]
      %v582 = vld [vmem:[%s4 + $0x10] sm:$0xff]
      %v583 = vld [vmem:[%s4 + $0x18] sm:$0xff]
      %v584 = vld [vmem:[%s4 + $0x20] sm:$0xff]
      %v585 = vld [vmem:[%s4 + $0x28] sm:$0xff]
      %v586 = vld [vmem:[%s4 + $0x30] sm:$0xff]
      %v587 = vld [vmem:[%s4 + $0x38] sm:$0xff]
      %v588 = vld [vmem:[%s4 + $0x40] sm:$0xff]
      %v589 = vld [vmem:[%s4 + $0x48] sm:$0xff]
      %v590 = vld [vmem:[%s4 + $0x50] sm:$0xff]
      %v591 = vld [vmem:[%s4 + $0x58] sm:$0xff]
      %v592 = vld [vmem:[%s4 + $0x60] sm:$0xff]
      %v593 = vld [vmem:[%s4 + $0x68] sm:$0xff]
      %v594 = vld [vmem:[%s4 + $0x70] sm:$0xff]
      %v595 = vld [vmem:[%s4 + $0x78] sm:$0xff]
      %596 = vmatprep.subr.mxu0 0.0
      %597 = vmatpush1.msra.mxu0 %v580
      %598 = vmatprep.subr.mxu0 0.0
      %599 = vmatpush1.msra.mxu0 %v581
      %600 = vmatprep.subr.mxu0 0.0
      %601 = vmatpush1.msra.mxu0 %v582
      %602 = vmatprep.subr.mxu0 0.0
      %603 = vmatpush1.msra.mxu0 %v583
      %604 = vmatprep.subr.mxu0 0.0
      %605 = vmatpush1.msra.mxu0 %v584
      %606 = vmatprep.subr.mxu0 0.0
      %607 = vmatpush1.msra.mxu0 %v585
      %608 = vmatprep.subr.mxu0 0.0
      %609 = vmatpush1.msra.mxu0 %v586
      %610 = vmatprep.subr.mxu0 0.0
      %611 = vmatpush1.msra.mxu0 %v587
      %612 = vmatprep.subr.mxu0 0.0
      %613 = vmatpush1.msra.mxu0 %v588
      %614 = vmatprep.subr.mxu0 0.0
      %615 = vmatpush1.msra.mxu0 %v589
      %616 = vmatprep.subr.mxu0 0.0
      %617 = vmatpush1.msra.mxu0 %v590
      %618 = vmatprep.subr.mxu0 0.0
      %619 = vmatpush1.msra.mxu0 %v591
      %620 = vmatprep.subr.mxu0 0.0
      %621 = vmatpush1.msra.mxu0 %v592
      %622 = vmatprep.subr.mxu0 0.0
      %623 = vmatpush1.msra.mxu0 %v593
      %624 = vmatprep.subr.mxu0 0.0
      %625 = vmatpush1.msra.mxu0 %v594
      %626 = vmatprep.subr.mxu0 0.0
      %627 = vmatpush1.msra.mxu0 %v595
      %628 = vmatprep.subr.mxu0 0.0
      %629 = vmatpush1.msra.mxu0 0.0
      %630 = vmatprep.subr.mxu0 0.0
      %631 = vmatpush1.msra.mxu0 0.0
      %632 = vmatprep.subr.mxu0 0.0
      %633 = vmatpush1.msra.mxu0 0.0
      %634 = vmatprep.subr.mxu0 0.0
      %635 = vmatpush1.msra.mxu0 0.0
      %636 = vmatprep.subr.mxu0 0.0
      %637 = vmatpush1.msra.mxu0 0.0
      %638 = vmatprep.subr.mxu0 0.0
      %639 = vmatpush1.msra.mxu0 0.0
      %640 = vmatprep.subr.mxu0 0.0
      %641 = vmatpush1.msra.mxu0 0.0
      %642 = vmatprep.subr.mxu0 0.0
      %643 = vmatpush1.msra.mxu0 0.0
      %644 = vmatprep.subr.mxu0 0.0
      %645 = vmatpush1.msra.mxu0 0.0
      %646 = vmatprep.subr.mxu0 0.0
      %647 = vmatpush1.msra.mxu0 0.0
      %648 = vmatprep.subr.mxu0 0.0
      %649 = vmatpush1.msra.mxu0 0.0
      %650 = vmatprep.subr.mxu0 0.0
      %651 = vmatpush1.msra.mxu0 0.0
      %652 = vmatprep.subr.mxu0 0.0
      %653 = vmatpush1.msra.mxu0 0.0
      %654 = vmatprep.subr.mxu0 0.0
      %655 = vmatpush1.msra.mxu0 0.0
      %656 = vmatprep.subr.mxu0 0.0
      %657 = vmatpush1.msra.mxu0 0.0
      %658 = vmatprep.subr.mxu0 0.0
      %659 = vmatpush1.msra.mxu0 0.0
      %660 = vmatprep.mubr.f32.mxu0 0.0
      %661 = vmatmul.mubr.f32.gmra.mrb[0].mxu0 %v576
      %v662 = vpop.f32.mrb[0].mxu0
      %v663 = vadd.f32 0.0, %v662
      %v664 = vpop.f32.mrb[0].mxu0
      %665 = vmatprep.mubr.f32.mxu0 0.0
      %666 = vmatmul.mubr.f32.gmra.mrb[0].mxu0 %v577
      %v667 = vpop.f32.mrb[0].mxu0
      %v668 = vadd.f32 0.0, %v667
      %v669 = vpop.f32.mrb[0].mxu0
      %670 = vdwg.mxu0
      %vm671 = vcmask 64512
      %v672 = vsel %vm671, %v663, 0.0
      %v673 = vsel %vm671, %v668, 0.0
      %v674 = vadd.f32 %v672, %v673
      %v675 = vrot.slane %v674, 4
      %v676 = vadd.f32 %v674, %v675
      %v677 = vrot.slane %v676, 2
      %v678 = vadd.f32 %v676, %v677
      %v679 = vrot.slane %v678, 1
      %v680 = vadd.f32 %v678, %v679
      %v681 = vmul.f32 %v576, %v576
      %v682 = vmul.f32 %v577, %v577
      %683 = vmatprep.subr.mxu0 0.0
      %684 = vmatpush1.msra.mxu0 %v580
      %685 = vmatprep.subr.mxu0 0.0
      %686 = vmatpush1.msra.mxu0 %v581
      %687 = vmatprep.subr.mxu0 0.0
      %688 = vmatpush1.msra.mxu0 %v582
      %689 = vmatprep.subr.mxu0 0.0
      %690 = vmatpush1.msra.mxu0 %v583
      %691 = vmatprep.subr.mxu0 0.0
      %692 = vmatpush1.msra.mxu0 %v584
      %693 = vmatprep.subr.mxu0 0.0
      %694 = vmatpush1.msra.mxu0 %v585
      %695 = vmatprep.subr.mxu0 0.0
      %696 = vmatpush1.msra.mxu0 %v586
      %697 = vmatprep.subr.mxu0 0.0
      %698 = vmatpush1.msra.mxu0 %v587
      %699 = vmatprep.subr.mxu0 0.0
      %700 = vmatpush1.msra.mxu0 %v588
      %701 = vmatprep.subr.mxu0 0.0
      %702 = vmatpush1.msra.mxu0 %v589
      %703 = vmatprep.subr.mxu0 0.0
      %704 = vmatpush1.msra.mxu0 %v590
      %705 = vmatprep.subr.mxu0 0.0
      %706 = vmatpush1.msra.mxu0 %v591
      %707 = vmatprep.subr.mxu0 0.0
      %708 = vmatpush1.msra.mxu0 %v592
      %709 = vmatprep.subr.mxu0 0.0
      %710 = vmatpush1.msra.mxu0 %v593
      %711 = vmatprep.subr.mxu0 0.0
      %712 = vmatpush1.msra.mxu0 %v594
      %713 = vmatprep.subr.mxu0 0.0
      %714 = vmatpush1.msra.mxu0 %v595
      %715 = vmatprep.subr.mxu0 0.0
      %716 = vmatpush1.msra.mxu0 0.0
      %717 = vmatprep.subr.mxu0 0.0
      %718 = vmatpush1.msra.mxu0 0.0
      %719 = vmatprep.subr.mxu0 0.0
      %720 = vmatpush1.msra.mxu0 0.0
      %721 = vmatprep.subr.mxu0 0.0
      %722 = vmatpush1.msra.mxu0 0.0
      %723 = vmatprep.subr.mxu0 0.0
      %724 = vmatpush1.msra.mxu0 0.0
      %725 = vmatprep.subr.mxu0 0.0
      %726 = vmatpush1.msra.mxu0 0.0
      %727 = vmatprep.subr.mxu0 0.0
      %728 = vmatpush1.msra.mxu0 0.0
      %729 = vmatprep.subr.mxu0 0.0
      %730 = vmatpush1.msra.mxu0 0.0
      %731 = vmatprep.subr.mxu0 0.0
      %732 = vmatpush1.msra.mxu0 0.0
      %733 = vmatprep.subr.mxu0 0.0
      %734 = vmatpush1.msra.mxu0 0.0
      %735 = vmatprep.subr.mxu0 0.0
      %736 = vmatpush1.msra.mxu0 0.0
      %737 = vmatprep.subr.mxu0 0.0
      %738 = vmatpush1.msra.mxu0 0.0
      %739 = vmatprep.subr.mxu0 0.0
      %740 = vmatpush1.msra.mxu0 0.0
      %741 = vmatprep.subr.mxu0 0.0
      %742 = vmatpush1.msra.mxu0 0.0
      %743 = vmatprep.subr.mxu0 0.0
      %744 = vmatpush1.msra.mxu0 0.0
      %745 = vmatprep.subr.mxu0 0.0
      %746 = vmatpush1.msra.mxu0 0.0
      %747 = vmatprep.mubr.f32.mxu0 0.0
      %748 = vmatmul.mubr.f32.gmra.mrb[0].mxu0 %v681
      %v749 = vpop.f32.mrb[0].mxu0
      %v750 = vadd.f32 0.0, %v749
      %v751 = vpop.f32.mrb[0].mxu0
      %752 = vmatprep.mubr.f32.mxu0 0.0
      %753 = vmatmul.mubr.f32.gmra.mrb[0].mxu0 %v682
      %v754 = vpop.f32.mrb[0].mxu0
      %v755 = vadd.f32 0.0, %v754
      %v756 = vpop.f32.mrb[0].mxu0
      %757 = vdwg.mxu0
      %v758 = vsel %vm671, %v750, 0.0
      %v759 = vsel %vm671, %v755, 0.0
      %v760 = vadd.f32 %v758, %v759
      %v761 = vrot.slane %v760, 4
      %v762 = vadd.f32 %v760, %v761
      %v763 = vrot.slane %v762, 2
      %v764 = vadd.f32 %v762, %v763
      %v765 = vrot.slane %v764, 1
      %v766 = vadd.f32 %v764, %v765
      %v767 = vsel %vm287, %v680, %v766
      %vm768 = vcmask 58368
      %769 = vst.msk [vmem:[%s262] sm:$0x3] %vm768, %v767
      %p770 = scmp.lt.s32.totalorder %s18, 1
      %s771 = scalar_select %p770, %s18, 1
      %s772 = smul.addr %s771, 2
      %s773 = smul.addr %s772, 8
      %s774 = scalar_lea.vmem %s5, %s773
      %p775 = scmp.lt.s32.totalorder %s18, 1
      %s776 = scalar_select %p775, %s18, 1
      %s777 = smul.addr %s776, 2
      %s778 = scalar_lea.vmem %s6, %s777
      // Predicated region
      $region41: #{double_conv2d_forward.4} parent=39 // pred_check
        %p779 = pneg %p146
      $region42: #{double_conv2d_forward.4} parent=39 // pred_check_branch
        %781 = sbr.rel (%p779) target = $region44
      $region43: #{double_conv2d_forward.4} parent=39 // pred_region
        _
      $region44: #{double_conv2d_forward.4} parent=39 // pred_fallthru
        _
      // Predicated region
      $region45: #{double_conv2d_forward.4} parent=39 // pred_check
        %p782 = pneg %p172
      $region46: #{double_conv2d_forward.4} parent=39 // pred_check_branch
        %784 = sbr.rel (%p782) target = $region48
      $region47: #{double_conv2d_forward.4} parent=39 // pred_region
        _
      $region48: #{double_conv2d_forward.4} parent=39 // pred_fallthru
        _
    $region40: #{double_conv2d_forward.4} parent=5 // pred_fallthru
      _
    %p785 = scmp.le.s32.totalorder 2, %s13
    // Predicated region
    $region49: #{double_conv2d_forward.4} parent=5 // pred_check
      %p786 = pneg %p785
    $region50: #{double_conv2d_forward.4} parent=5 // pred_check_branch
      %788 = sbr.rel (%p786) target = $region52
    $region51: #{double_conv2d_forward.4} parent=5 // pred_region
      %s789 = ssub.s32 %s13, 2
      // Predicated region
      $region53: #{double_conv2d_forward.4} parent=51 // pred_check
        %p790 = pneg %p152
      $region54: #{double_conv2d_forward.4} parent=51 // pred_check_branch
        %792 = sbr.rel (%p790) target = $region56
      $region55: #{double_conv2d_forward.4} parent=51 // pred_region
        %p793 = scmp.lt.s32.totalorder %s19, 1
        %s794 = scalar_select %p793, %s19, 1
        %s795 = smul.addr %s794, 2
        %s796 = smul.addr %s795, 8
        %s797 = scalar_lea.vmem %s5, %s796
      $region56: #{double_conv2d_forward.4} parent=51 // pred_fallthru
        _
      // Predicated region
      $region57: #{double_conv2d_forward.4} parent=51 // pred_check
        %p798 = pneg %p178
      $region58: #{double_conv2d_forward.4} parent=51 // pred_check_branch
        %800 = sbr.rel (%p798) target = $region60
      $region59: #{double_conv2d_forward.4} parent=51 // pred_region
        %p801 = scmp.lt.s32.totalorder %s19, 1
        %s802 = scalar_select %p801, %s19, 1
        %s803 = smul.addr %s802, 2
        %s804 = scalar_lea.vmem %s6, %s803
      $region60: #{double_conv2d_forward.4} parent=51 // pred_fallthru
        _
    $region52: #{double_conv2d_forward.4} parent=5 // pred_fallthru
      _
  $region6: #{double_conv2d_forward.4} parent=0 // loop_footer
    %s17 = sadd.s32 1, %s13
  $region7: #{double_conv2d_forward.4} parent=0 // loop_footer_branch
    %12 = sbr.rel target = $region3
  $region8: #{double_conv2d_forward.4} parent=0 // loop_exit
    _

</llo_original>
